<compile_context>
chip_gen: v6e
topology: v6e:2x2x1
jax: 0.10.0
libtpu: 0.0.40
codegen_flags: <defaults>
</compile_context>

<pallas_src>
import math

import jax
import jax.numpy as jnp
from jax.experimental import pallas as pl

# ---- problem sizes (small, consistent with the module) ----
D_MODEL = 32
NHEAD = 4
HEAD_DIM = D_MODEL // NHEAD
DIM_FF = 128
L_TGT = 8
L_MEM = 8
SEQ = L_TGT + L_MEM
BATCH = 2
M_ROWS = SEQ * BATCH
LN_EPS = 1e-5


# ---- matmul helpers: bf16 operands, fp32 accumulation (MXU-friendly) ----
def _mm(a, b):
    return jnp.dot(a.astype(jnp.bfloat16), b.astype(jnp.bfloat16),
                   preferred_element_type=jnp.float32)


def _mm_nt(a, b):
    # a (M, K) x b (N, K)^T -> (M, N) without materializing a transpose
    return jax.lax.dot_general(
        a.astype(jnp.bfloat16), b.astype(jnp.bfloat16),
        dimension_numbers=(((1,), (1,)), ((), ())),
        preferred_element_type=jnp.float32)


def vlsa_kernel(tgt_ref, mem_ref,
                wqkv_ref, bqkv_ref, wo_ref, bo_ref, g_ref, beta_ref,
                w1_ref, b1_ref, w2_ref, b2_ref,
                vis_ref, txt_ref):
    # --- build the batch-folded activation slab once: row m = s*BATCH + b ---
    x3 = jnp.concatenate([tgt_ref[...], mem_ref[...]], axis=0)       # (SEQ, B, E)
    x = x3.reshape(M_ROWS, D_MODEL)                                   # (M, E) fp32
    xb = x.astype(jnp.bfloat16)

    # --- constant cross-batch mask (rows attend only within their own batch element) ---
    row = jax.lax.broadcasted_iota(jnp.int32, (M_ROWS, M_ROWS), 0)
    col = jax.lax.broadcasted_iota(jnp.int32, (M_ROWS, M_ROWS), 1)
    mask = jnp.where((row % BATCH) == (col % BATCH), 0.0, -1e9).astype(jnp.float32)

    # --- fused QKV projection: one (M,E)x(E,3E) matmul (q columns pre-scaled) ---
    qkv = _mm(xb, wqkv_ref[...]) + bqkv_ref[...]                      # (M, 3E) fp32

    # --- per-head attention; q/k/v are lane slices of the fused projection ---
    hv_parts = []
    for h in range(NHEAD):  # static unroll; 4 heads
        lo = h * HEAD_DIM
        q = qkv[:, lo:lo + HEAD_DIM]
        k = qkv[:, D_MODEL + lo:D_MODEL + lo + HEAD_DIM]
        v = qkv[:, 2 * D_MODEL + lo:2 * D_MODEL + lo + HEAD_DIM]
        s = _mm_nt(q, k) + mask                                       # (M, M)
        s = s - jnp.max(s, axis=-1, keepdims=True)
        p = jnp.exp(s)
        p = p * pl.reciprocal(jnp.sum(p, axis=-1, keepdims=True), approx=True)
        hv_parts.append(_mm(p, v))                                    # (M, HEAD_DIM)

    # --- fused output projection: lane-pack heads, one (M,E)x(E,E) matmul ---
    hv = jnp.concatenate(hv_parts, axis=-1)                           # (M, E)
    attn = _mm(hv, wo_ref[...]) + bo_ref[...]                         # (M, E)

    # --- residual + LayerNorm (dropout1 = identity); var = E[x^2] - mu^2 ---
    x1 = x + attn
    mu = jnp.mean(x1, axis=-1, keepdims=True)
    ex2 = jnp.mean(x1 * x1, axis=-1, keepdims=True)
    var = ex2 - mu * mu
    xn = (x1 - mu) * jax.lax.rsqrt(var + LN_EPS) * g_ref[...] + beta_ref[...]

    # --- FeedForward (relu) + residual (dropout2 / FFN drop = identity) ---
    h1 = jnp.maximum(_mm(xn, w1_ref[...]) + b1_ref[...], 0.0)         # (M, DIM_FF)
    y = xn + _mm(h1, w2_ref[...]) + b2_ref[...]                       # (M, E)

    # --- split back into (vis, txt): two dense full-tile stores in seq-first layout ---
    y3 = y.reshape(SEQ, BATCH, D_MODEL)
    vis_ref[...] = y3[:L_TGT]
    txt_ref[...] = y3[L_TGT:]


def prepare_params(p):
    """One-time conversion of PyTorch-layout params into the kernel's fused/lane-aligned layout."""
    E = D_MODEL
    scale = 1.0 / math.sqrt(HEAD_DIM)
    in_w = p["in_w"]            # (3E, E) packed q/k/v (PyTorch in_proj_weight layout)
    in_b = p["in_b"][0]         # (3E,)
    # scale only the q columns (first E outputs)
    scale_vec = jnp.concatenate([jnp.full((E,), scale, jnp.float32),
                                 jnp.ones((2 * E,), jnp.float32)])
    return {
        "w_qkv": (in_w.T * scale_vec[None, :]).astype(jnp.bfloat16),   # (E, 3E)
        "b_qkv": (in_b * scale_vec)[None, :].astype(jnp.float32),      # (1, 3E)
        "wo": jnp.transpose(p["out_w"], (1, 0)).astype(jnp.bfloat16),  # (E, E)  = out_w.T
        "bo": p["out_b"].astype(jnp.float32),                          # (1, E)
        "g": p["ln_g"].astype(jnp.float32),                            # (1, E)
        "beta": p["ln_b"].astype(jnp.float32),                         # (1, E)
        "w1": jnp.transpose(p["fc1_w"], (1, 0)).astype(jnp.bfloat16),  # (E, DIM_FF)
        "b1": p["fc1_b"].astype(jnp.float32),                          # (1, DIM_FF)
        "w2": jnp.transpose(p["fc2_w"], (1, 0)).astype(jnp.bfloat16),  # (DIM_FF, E)
        "b2": p["fc2_b"].astype(jnp.float32),                          # (1, E)
    }


@jax.jit
def vlsa_adapter(tgt, memory, kp):
    """tgt: (L_tgt, B, E), memory: (L_mem, B, E) -> (vis, txt) in the same seq-first layout."""
    E, H = D_MODEL, DIM_FF

    def full(shape):
        return pl.BlockSpec(shape, lambda: (0,) * len(shape))

    in_specs = [
        full((L_TGT, BATCH, E)),   # tgt
        full((L_MEM, BATCH, E)),   # memory
        full((E, 3 * E)),          # fused qkv weight
        full((1, 3 * E)),          # fused qkv bias
        full((E, E)),              # out_proj weight (transposed)
        full((1, E)),              # out_proj bias
        full((1, E)),              # norm1 gamma
        full((1, E)),              # norm1 beta
        full((E, H)),              # fc1 weight (E, H)
        full((1, H)),              # fc1 bias
        full((H, E)),              # fc2 weight (H, E)
        full((1, E)),              # fc2 bias
    ]
    out_specs = (full((L_TGT, BATCH, E)), full((L_MEM, BATCH, E)))

    vis, txt = pl.pallas_call(
        vlsa_kernel,
        out_shape=(jax.ShapeDtypeStruct((L_TGT, BATCH, E), jnp.float32),
                   jax.ShapeDtypeStruct((L_MEM, BATCH, E), jnp.float32)),
        in_specs=in_specs,
        out_specs=out_specs,
    )(tgt, memory,
      kp["w_qkv"], kp["b_qkv"], kp["wo"], kp["bo"], kp["g"], kp["beta"],
      kp["w1"], kp["b1"], kp["w2"], kp["b2"])
    return vis, txt


# ---- pure-JAX reference (fp32, PyTorch-layout params) for a correctness sanity check ----
def _ref_one(x, p):  # x: (S, E)
    qkv = x @ p["in_w"].T + p["in_b"][0]
    q, k, v = qkv[:, :D_MODEL], qkv[:, D_MODEL:2 * D_MODEL], qkv[:, 2 * D_MODEL:]
    scale = 1.0 / math.sqrt(HEAD_DIM)
    heads = []
    for h in range(NHEAD):
        sl = slice(h * HEAD_DIM, (h + 1) * HEAD_DIM)
        s = (q[:, sl] * scale) @ k[:, sl].T
        p_ = jax.nn.softmax(s, axis=-1)
        heads.append(p_ @ v[:, sl])
    attn = jnp.concatenate(heads, axis=-1) @ p["out_w"].T + p["out_b"][0]
    x1 = x + attn
    mu = jnp.mean(x1, axis=-1, keepdims=True)
    var = jnp.mean((x1 - mu) ** 2, axis=-1, keepdims=True)
    xn = (x1 - mu) / jnp.sqrt(var + LN_EPS) * p["ln_g"][0] + p["ln_b"][0]
    h1 = jnp.maximum(xn @ p["fc1_w"].T + p["fc1_b"][0], 0.0)
    return xn + h1 @ p["fc2_w"].T + p["fc2_b"][0]


def ref_forward(tgt, memory, p):
    x = jnp.concatenate([tgt, memory], axis=0)           # (S, B, E)
    xb = jnp.transpose(x, (1, 0, 2))                     # (B, S, E)
    out = jax.vmap(_ref_one, in_axes=(0, None))(xb, p)
    out = jnp.transpose(out, (1, 0, 2))                  # (S, B, E)
    return out[:L_TGT], out[L_TGT:]


def init_params(key):
    ks = jax.random.split(key, 8)
    E, H = D_MODEL, DIM_FF
    return {
        "in_w":  0.05 * jax.random.normal(ks[0], (3 * E, E), jnp.float32),
        "in_b":  0.02 * jax.random.normal(ks[1], (1, 3 * E), jnp.float32),
        "out_w": 0.05 * jax.random.normal(ks[2], (E, E), jnp.float32),
        "out_b": 0.02 * jax.random.normal(ks[3], (1, E), jnp.float32),
        "ln_g":  jnp.ones((1, E), jnp.float32),
        "ln_b":  jnp.zeros((1, E), jnp.float32),
        "fc1_w": 0.05 * jax.random.normal(ks[4], (H, E), jnp.float32),
        "fc1_b": 0.02 * jax.random.normal(ks[5], (1, H), jnp.float32),
        "fc2_w": 0.05 * jax.random.normal(ks[6], (E, H), jnp.float32),
        "fc2_b": 0.02 * jax.random.normal(ks[7], (1, E), jnp.float32),
    }


if __name__ == "__main__":
    key = jax.random.PRNGKey(0)
    k_tgt, k_mem, k_par = jax.random.split(key, 3)
    tgt = jax.random.normal(k_tgt, (L_TGT, BATCH, D_MODEL), jnp.float32)
    memory = jax.random.normal(k_mem, (L_MEM, BATCH, D_MODEL), jnp.float32)
    params = init_params(k_par)
    kparams = prepare_params(params)

    vis, txt = vlsa_adapter(tgt, memory, kparams)
    vis = jax.block_until_ready(vis)
    txt = jax.block_until_ready(txt)

    vis_ref, txt_ref = ref_forward(tgt, memory, params)
    assert vis.shape == (L_TGT, BATCH, D_MODEL) and txt.shape == (L_MEM, BATCH, D_MODEL)
    assert jnp.allclose(vis, vis_ref, atol=2e-2, rtol=2e-2)
    assert jnp.allclose(txt, txt_ref, atol=2e-2, rtol=2e-2)

    print("KERNEL_OK")
</pallas_src>

<mosaic_0001>
module attributes {stable_mosaic.version = 11 : i64} {
  func.func @vlsa_kernel(%arg0: memref<8x2x32xf32, #tpu.memory_space<vmem>>, %arg1: memref<8x2x32xf32, #tpu.memory_space<vmem>>, %arg2: memref<32x96xbf16, #tpu.memory_space<vmem>>, %arg3: memref<1x96xf32, #tpu.memory_space<vmem>>, %arg4: memref<32x32xbf16, #tpu.memory_space<vmem>>, %arg5: memref<1x32xf32, #tpu.memory_space<vmem>>, %arg6: memref<1x32xf32, #tpu.memory_space<vmem>>, %arg7: memref<1x32xf32, #tpu.memory_space<vmem>>, %arg8: memref<32x128xbf16, #tpu.memory_space<vmem>>, %arg9: memref<1x128xf32, #tpu.memory_space<vmem>>, %arg10: memref<128x32xbf16, #tpu.memory_space<vmem>>, %arg11: memref<1x32xf32, #tpu.memory_space<vmem>>, %arg12: memref<8x2x32xf32, #tpu.memory_space<vmem>>, %arg13: memref<8x2x32xf32, #tpu.memory_space<vmem>>) attributes {dimension_semantics = [], scalar_prefetch = 0 : i64, scratch_operands = 0 : i64, tpu.core_type = #tpu.core_type<tc>} {
    %c0 = arith.constant 0 : index
    %c0_0 = arith.constant 0 : index
    %c0_1 = arith.constant 0 : index
    %0 = vector.load %arg0[%c0, %c0_0, %c0_1] : memref<8x2x32xf32, #tpu.memory_space<vmem>>, vector<8x2x32xf32>
    %c0_2 = arith.constant 0 : index
    %c0_3 = arith.constant 0 : index
    %c0_4 = arith.constant 0 : index
    %1 = vector.load %arg1[%c0_2, %c0_3, %c0_4] : memref<8x2x32xf32, #tpu.memory_space<vmem>>, vector<8x2x32xf32>
    %2 = tpu.concatenate %0, %1 in 0 : vector<8x2x32xf32>, vector<8x2x32xf32> -> vector<16x2x32xf32>
    %3 = vector.shape_cast %2 : vector<16x2x32xf32> to vector<32x32xf32>
    %4 = arith.truncf %3 : vector<32x32xf32> to vector<32x32xbf16>
    %5 = tpu.iota {dimensions = array<i32: 0>} : vector<32x32xi32>
    %6 = tpu.iota {dimensions = array<i32: 1>} : vector<32x32xi32>
    %c2_i32 = arith.constant 2 : i32
    %c0_i32 = arith.constant 0 : i32
    %7 = arith.cmpi eq, %c2_i32, %c0_i32 : i32
    %c1_i32 = arith.constant 1 : i32
    %8 = arith.select %7, %c1_i32, %c2_i32 : i32
    %9 = vector.broadcast %8 : i32 to vector<32x32xi32>
    %10 = arith.remsi %5, %9 : vector<32x32xi32>
    %c0_i32_5 = arith.constant 0 : i32
    %11 = vector.broadcast %c0_i32_5 : i32 to vector<32x32xi32>
    %12 = arith.cmpi ne, %10, %11 : vector<32x32xi32>
    %c0_i32_6 = arith.constant 0 : i32
    %13 = vector.broadcast %c0_i32_6 : i32 to vector<32x32xi32>
    %14 = arith.cmpi slt, %10, %13 : vector<32x32xi32>
    %c0_i32_7 = arith.constant 0 : i32
    %15 = arith.cmpi slt, %8, %c0_i32_7 : i32
    %16 = vector.broadcast %15 : i1 to vector<32x32xi1>
    %17 = vector.broadcast %16 : vector<32x32xi1> to vector<32x32xi1>
    %18 = arith.xori %14, %17 : vector<32x32xi1>
    %19 = arith.andi %18, %12 : vector<32x32xi1>
    %20 = vector.broadcast %8 : i32 to vector<32x32xi32>
    %21 = arith.addi %10, %20 : vector<32x32xi32>
    %22 = arith.select %19, %21, %10 : vector<32x32xi1>, vector<32x32xi32>
    %c2_i32_8 = arith.constant 2 : i32
    %c0_i32_9 = arith.constant 0 : i32
    %23 = arith.cmpi eq, %c2_i32_8, %c0_i32_9 : i32
    %c1_i32_10 = arith.constant 1 : i32
    %24 = arith.select %23, %c1_i32_10, %c2_i32_8 : i32
    %25 = vector.broadcast %24 : i32 to vector<32x32xi32>
    %26 = arith.remsi %6, %25 : vector<32x32xi32>
    %c0_i32_11 = arith.constant 0 : i32
    %27 = vector.broadcast %c0_i32_11 : i32 to vector<32x32xi32>
    %28 = arith.cmpi ne, %26, %27 : vector<32x32xi32>
    %c0_i32_12 = arith.constant 0 : i32
    %29 = vector.broadcast %c0_i32_12 : i32 to vector<32x32xi32>
    %30 = arith.cmpi slt, %26, %29 : vector<32x32xi32>
    %c0_i32_13 = arith.constant 0 : i32
    %31 = arith.cmpi slt, %24, %c0_i32_13 : i32
    %32 = vector.broadcast %31 : i1 to vector<32x32xi1>
    %33 = vector.broadcast %32 : vector<32x32xi1> to vector<32x32xi1>
    %34 = arith.xori %30, %33 : vector<32x32xi1>
    %35 = arith.andi %34, %28 : vector<32x32xi1>
    %36 = vector.broadcast %24 : i32 to vector<32x32xi32>
    %37 = arith.addi %26, %36 : vector<32x32xi32>
    %38 = arith.select %35, %37, %26 : vector<32x32xi1>, vector<32x32xi32>
    %39 = arith.cmpi eq, %22, %38 : vector<32x32xi32>
    %cst = arith.constant 0.000000e+00 : f32
    %cst_14 = arith.constant -1.000000e+09 : f32
    %40 = vector.broadcast %cst : f32 to vector<32x32xf32>
    %41 = vector.broadcast %cst_14 : f32 to vector<32x32xf32>
    %42 = arith.select %39, %40, %41 : vector<32x32xi1>, vector<32x32xf32>
    %c0_15 = arith.constant 0 : index
    %c0_16 = arith.constant 0 : index
    %43 = vector.load %arg2[%c0_15, %c0_16] : memref<32x96xbf16, #tpu.memory_space<vmem>>, vector<32x96xbf16>
    %cst_17 = arith.constant dense<0.000000e+00> : vector<32x96xf32>
    %44 = tpu.matmul %4, %43, %cst_17 {dimension_numbers = #tpu.dot_dimension_numbers<[1], [0], [0], [1], [0, 0, 1, 1], [], []>} : vector<32x32xbf16>, vector<32x96xbf16>, vector<32x96xf32> -> vector<32x96xf32>
    %c0_18 = arith.constant 0 : index
    %c0_19 = arith.constant 0 : index
    %45 = vector.load %arg3[%c0_18, %c0_19] : memref<1x96xf32, #tpu.memory_space<vmem>>, vector<1x96xf32>
    %46 = vector.broadcast %45 : vector<1x96xf32> to vector<32x96xf32>
    %47 = arith.addf %44, %46 : vector<32x96xf32>
    %48 = vector.extract_strided_slice %47 {offsets = [0, 0], sizes = [32, 8], strides = [1, 1]} : vector<32x96xf32> to vector<32x8xf32>
    %49 = vector.extract_strided_slice %47 {offsets = [0, 32], sizes = [32, 8], strides = [1, 1]} : vector<32x96xf32> to vector<32x8xf32>
    %50 = vector.extract_strided_slice %47 {offsets = [0, 64], sizes = [32, 8], strides = [1, 1]} : vector<32x96xf32> to vector<32x8xf32>
    %51 = arith.truncf %48 : vector<32x8xf32> to vector<32x8xbf16>
    %52 = arith.truncf %49 : vector<32x8xf32> to vector<32x8xbf16>
    %cst_20 = arith.constant dense<0.000000e+00> : vector<32x32xf32>
    %53 = tpu.matmul %51, %52, %cst_20 {dimension_numbers = #tpu.dot_dimension_numbers<[1], [1], [0], [0], [0, 0, 1, 0], [], []>} : vector<32x8xbf16>, vector<32x8xbf16>, vector<32x32xf32> -> vector<32x32xf32>
    %54 = arith.addf %53, %42 : vector<32x32xf32>
    %cst_21 = arith.constant dense<0xFF800000> : vector<32xf32>
    %55 = vector.multi_reduction <maximumf>, %54, %cst_21 [1] : vector<32x32xf32> to vector<32xf32>
    %56 = vector.shape_cast %55 : vector<32xf32> to vector<32x1xf32>
    %57 = vector.broadcast %56 : vector<32x1xf32> to vector<32x32xf32>
    %58 = arith.subf %54, %57 : vector<32x32xf32>
    %59 = math.exp %58 : vector<32x32xf32>
    %cst_22 = arith.constant dense<0.000000e+00> : vector<32xf32>
    %60 = vector.multi_reduction <add>, %59, %cst_22 [1] : vector<32x32xf32> to vector<32xf32>
    %61 = vector.shape_cast %60 : vector<32xf32> to vector<32x1xf32>
    %62 = tpu.reciprocal %61 {approx = true} : vector<32x1xf32> -> vector<32x1xf32>
    %63 = vector.broadcast %62 : vector<32x1xf32> to vector<32x32xf32>
    %64 = arith.mulf %59, %63 : vector<32x32xf32>
    %65 = arith.truncf %64 : vector<32x32xf32> to vector<32x32xbf16>
    %66 = arith.truncf %50 : vector<32x8xf32> to vector<32x8xbf16>
    %cst_23 = arith.constant dense<0.000000e+00> : vector<32x8xf32>
    %67 = tpu.matmul %65, %66, %cst_23 {dimension_numbers = #tpu.dot_dimension_numbers<[1], [0], [0], [1], [0, 0, 1, 1], [], []>} : vector<32x32xbf16>, vector<32x8xbf16>, vector<32x8xf32> -> vector<32x8xf32>
    %68 = vector.extract_strided_slice %47 {offsets = [0, 8], sizes = [32, 8], strides = [1, 1]} : vector<32x96xf32> to vector<32x8xf32>
    %69 = vector.extract_strided_slice %47 {offsets = [0, 40], sizes = [32, 8], strides = [1, 1]} : vector<32x96xf32> to vector<32x8xf32>
    %70 = vector.extract_strided_slice %47 {offsets = [0, 72], sizes = [32, 8], strides = [1, 1]} : vector<32x96xf32> to vector<32x8xf32>
    %71 = arith.truncf %68 : vector<32x8xf32> to vector<32x8xbf16>
    %72 = arith.truncf %69 : vector<32x8xf32> to vector<32x8xbf16>
    %cst_24 = arith.constant dense<0.000000e+00> : vector<32x32xf32>
    %73 = tpu.matmul %71, %72, %cst_24 {dimension_numbers = #tpu.dot_dimension_numbers<[1], [1], [0], [0], [0, 0, 1, 0], [], []>} : vector<32x8xbf16>, vector<32x8xbf16>, vector<32x32xf32> -> vector<32x32xf32>
    %74 = arith.addf %73, %42 : vector<32x32xf32>
    %cst_25 = arith.constant dense<0xFF800000> : vector<32xf32>
    %75 = vector.multi_reduction <maximumf>, %74, %cst_25 [1] : vector<32x32xf32> to vector<32xf32>
    %76 = vector.shape_cast %75 : vector<32xf32> to vector<32x1xf32>
    %77 = vector.broadcast %76 : vector<32x1xf32> to vector<32x32xf32>
    %78 = arith.subf %74, %77 : vector<32x32xf32>
    %79 = math.exp %78 : vector<32x32xf32>
    %cst_26 = arith.constant dense<0.000000e+00> : vector<32xf32>
    %80 = vector.multi_reduction <add>, %79, %cst_26 [1] : vector<32x32xf32> to vector<32xf32>
    %81 = vector.shape_cast %80 : vector<32xf32> to vector<32x1xf32>
    %82 = tpu.reciprocal %81 {approx = true} : vector<32x1xf32> -> vector<32x1xf32>
    %83 = vector.broadcast %82 : vector<32x1xf32> to vector<32x32xf32>
    %84 = arith.mulf %79, %83 : vector<32x32xf32>
    %85 = arith.truncf %84 : vector<32x32xf32> to vector<32x32xbf16>
    %86 = arith.truncf %70 : vector<32x8xf32> to vector<32x8xbf16>
    %cst_27 = arith.constant dense<0.000000e+00> : vector<32x8xf32>
    %87 = tpu.matmul %85, %86, %cst_27 {dimension_numbers = #tpu.dot_dimension_numbers<[1], [0], [0], [1], [0, 0, 1, 1], [], []>} : vector<32x32xbf16>, vector<32x8xbf16>, vector<32x8xf32> -> vector<32x8xf32>
    %88 = vector.extract_strided_slice %47 {offsets = [0, 16], sizes = [32, 8], strides = [1, 1]} : vector<32x96xf32> to vector<32x8xf32>
    %89 = vector.extract_strided_slice %47 {offsets = [0, 48], sizes = [32, 8], strides = [1, 1]} : vector<32x96xf32> to vector<32x8xf32>
    %90 = vector.extract_strided_slice %47 {offsets = [0, 80], sizes = [32, 8], strides = [1, 1]} : vector<32x96xf32> to vector<32x8xf32>
    %91 = arith.truncf %88 : vector<32x8xf32> to vector<32x8xbf16>
    %92 = arith.truncf %89 : vector<32x8xf32> to vector<32x8xbf16>
    %cst_28 = arith.constant dense<0.000000e+00> : vector<32x32xf32>
    %93 = tpu.matmul %91, %92, %cst_28 {dimension_numbers = #tpu.dot_dimension_numbers<[1], [1], [0], [0], [0, 0, 1, 0], [], []>} : vector<32x8xbf16>, vector<32x8xbf16>, vector<32x32xf32> -> vector<32x32xf32>
    %94 = arith.addf %93, %42 : vector<32x32xf32>
    %cst_29 = arith.constant dense<0xFF800000> : vector<32xf32>
    %95 = vector.multi_reduction <maximumf>, %94, %cst_29 [1] : vector<32x32xf32> to vector<32xf32>
    %96 = vector.shape_cast %95 : vector<32xf32> to vector<32x1xf32>
    %97 = vector.broadcast %96 : vector<32x1xf32> to vector<32x32xf32>
    %98 = arith.subf %94, %97 : vector<32x32xf32>
    %99 = math.exp %98 : vector<32x32xf32>
    %cst_30 = arith.constant dense<0.000000e+00> : vector<32xf32>
    %100 = vector.multi_reduction <add>, %99, %cst_30 [1] : vector<32x32xf32> to vector<32xf32>
    %101 = vector.shape_cast %100 : vector<32xf32> to vector<32x1xf32>
    %102 = tpu.reciprocal %101 {approx = true} : vector<32x1xf32> -> vector<32x1xf32>
    %103 = vector.broadcast %102 : vector<32x1xf32> to vector<32x32xf32>
    %104 = arith.mulf %99, %103 : vector<32x32xf32>
    %105 = arith.truncf %104 : vector<32x32xf32> to vector<32x32xbf16>
    %106 = arith.truncf %90 : vector<32x8xf32> to vector<32x8xbf16>
    %cst_31 = arith.constant dense<0.000000e+00> : vector<32x8xf32>
    %107 = tpu.matmul %105, %106, %cst_31 {dimension_numbers = #tpu.dot_dimension_numbers<[1], [0], [0], [1], [0, 0, 1, 1], [], []>} : vector<32x32xbf16>, vector<32x8xbf16>, vector<32x8xf32> -> vector<32x8xf32>
    %108 = vector.extract_strided_slice %47 {offsets = [0, 24], sizes = [32, 8], strides = [1, 1]} : vector<32x96xf32> to vector<32x8xf32>
    %109 = vector.extract_strided_slice %47 {offsets = [0, 56], sizes = [32, 8], strides = [1, 1]} : vector<32x96xf32> to vector<32x8xf32>
    %110 = vector.extract_strided_slice %47 {offsets = [0, 88], sizes = [32, 8], strides = [1, 1]} : vector<32x96xf32> to vector<32x8xf32>
    %111 = arith.truncf %108 : vector<32x8xf32> to vector<32x8xbf16>
    %112 = arith.truncf %109 : vector<32x8xf32> to vector<32x8xbf16>
    %cst_32 = arith.constant dense<0.000000e+00> : vector<32x32xf32>
    %113 = tpu.matmul %111, %112, %cst_32 {dimension_numbers = #tpu.dot_dimension_numbers<[1], [1], [0], [0], [0, 0, 1, 0], [], []>} : vector<32x8xbf16>, vector<32x8xbf16>, vector<32x32xf32> -> vector<32x32xf32>
    %114 = arith.addf %113, %42 : vector<32x32xf32>
    %cst_33 = arith.constant dense<0xFF800000> : vector<32xf32>
    %115 = vector.multi_reduction <maximumf>, %114, %cst_33 [1] : vector<32x32xf32> to vector<32xf32>
    %116 = vector.shape_cast %115 : vector<32xf32> to vector<32x1xf32>
    %117 = vector.broadcast %116 : vector<32x1xf32> to vector<32x32xf32>
    %118 = arith.subf %114, %117 : vector<32x32xf32>
    %119 = math.exp %118 : vector<32x32xf32>
    %cst_34 = arith.constant dense<0.000000e+00> : vector<32xf32>
    %120 = vector.multi_reduction <add>, %119, %cst_34 [1] : vector<32x32xf32> to vector<32xf32>
    %121 = vector.shape_cast %120 : vector<32xf32> to vector<32x1xf32>
    %122 = tpu.reciprocal %121 {approx = true} : vector<32x1xf32> -> vector<32x1xf32>
    %123 = vector.broadcast %122 : vector<32x1xf32> to vector<32x32xf32>
    %124 = arith.mulf %119, %123 : vector<32x32xf32>
    %125 = arith.truncf %124 : vector<32x32xf32> to vector<32x32xbf16>
    %126 = arith.truncf %110 : vector<32x8xf32> to vector<32x8xbf16>
    %cst_35 = arith.constant dense<0.000000e+00> : vector<32x8xf32>
    %127 = tpu.matmul %125, %126, %cst_35 {dimension_numbers = #tpu.dot_dimension_numbers<[1], [0], [0], [1], [0, 0, 1, 1], [], []>} : vector<32x32xbf16>, vector<32x8xbf16>, vector<32x8xf32> -> vector<32x8xf32>
    %128 = tpu.concatenate %67, %87, %107, %127 in 1 : vector<32x8xf32>, vector<32x8xf32>, vector<32x8xf32>, vector<32x8xf32> -> vector<32x32xf32>
    %c0_36 = arith.constant 0 : index
    %c0_37 = arith.constant 0 : index
    %129 = vector.load %arg4[%c0_36, %c0_37] : memref<32x32xbf16, #tpu.memory_space<vmem>>, vector<32x32xbf16>
    %130 = arith.truncf %128 : vector<32x32xf32> to vector<32x32xbf16>
    %cst_38 = arith.constant dense<0.000000e+00> : vector<32x32xf32>
    %131 = tpu.matmul %130, %129, %cst_38 {dimension_numbers = #tpu.dot_dimension_numbers<[1], [0], [0], [1], [0, 0, 1, 1], [], []>} : vector<32x32xbf16>, vector<32x32xbf16>, vector<32x32xf32> -> vector<32x32xf32>
    %c0_39 = arith.constant 0 : index
    %c0_40 = arith.constant 0 : index
    %132 = vector.load %arg5[%c0_39, %c0_40] : memref<1x32xf32, #tpu.memory_space<vmem>>, vector<1x32xf32>
    %133 = vector.broadcast %132 : vector<1x32xf32> to vector<32x32xf32>
    %134 = arith.addf %131, %133 : vector<32x32xf32>
    %135 = arith.addf %3, %134 : vector<32x32xf32>
    %cst_41 = arith.constant dense<0.000000e+00> : vector<32xf32>
    %136 = vector.multi_reduction <add>, %135, %cst_41 [1] : vector<32x32xf32> to vector<32xf32>
    %137 = vector.shape_cast %136 : vector<32xf32> to vector<32x1xf32>
    %cst_42 = arith.constant 3.200000e+01 : f32
    %138 = vector.broadcast %cst_42 : f32 to vector<32x1xf32>
    %139 = arith.divf %137, %138 : vector<32x1xf32>
    %140 = arith.mulf %135, %135 : vector<32x32xf32>
    %cst_43 = arith.constant dense<0.000000e+00> : vector<32xf32>
    %141 = vector.multi_reduction <add>, %140, %cst_43 [1] : vector<32x32xf32> to vector<32xf32>
    %142 = vector.shape_cast %141 : vector<32xf32> to vector<32x1xf32>
    %cst_44 = arith.constant 3.200000e+01 : f32
    %143 = vector.broadcast %cst_44 : f32 to vector<32x1xf32>
    %144 = arith.divf %142, %143 : vector<32x1xf32>
    %145 = arith.mulf %139, %139 : vector<32x1xf32>
    %146 = arith.subf %144, %145 : vector<32x1xf32>
    %147 = vector.broadcast %139 : vector<32x1xf32> to vector<32x32xf32>
    %148 = arith.subf %135, %147 : vector<32x32xf32>
    %cst_45 = arith.constant 9.99999974E-6 : f32
    %149 = vector.broadcast %cst_45 : f32 to vector<32x1xf32>
    %150 = arith.addf %146, %149 : vector<32x1xf32>
    %151 = math.rsqrt %150 : vector<32x1xf32>
    %152 = vector.broadcast %151 : vector<32x1xf32> to vector<32x32xf32>
    %153 = arith.mulf %148, %152 : vector<32x32xf32>
    %c0_46 = arith.constant 0 : index
    %c0_47 = arith.constant 0 : index
    %154 = vector.load %arg6[%c0_46, %c0_47] : memref<1x32xf32, #tpu.memory_space<vmem>>, vector<1x32xf32>
    %155 = vector.broadcast %154 : vector<1x32xf32> to vector<32x32xf32>
    %156 = arith.mulf %153, %155 : vector<32x32xf32>
    %c0_48 = arith.constant 0 : index
    %c0_49 = arith.constant 0 : index
    %157 = vector.load %arg7[%c0_48, %c0_49] : memref<1x32xf32, #tpu.memory_space<vmem>>, vector<1x32xf32>
    %158 = vector.broadcast %157 : vector<1x32xf32> to vector<32x32xf32>
    %159 = arith.addf %156, %158 : vector<32x32xf32>
    %c0_50 = arith.constant 0 : index
    %c0_51 = arith.constant 0 : index
    %160 = vector.load %arg8[%c0_50, %c0_51] : memref<32x128xbf16, #tpu.memory_space<vmem>>, vector<32x128xbf16>
    %161 = arith.truncf %159 : vector<32x32xf32> to vector<32x32xbf16>
    %cst_52 = arith.constant dense<0.000000e+00> : vector<32x128xf32>
    %162 = tpu.matmul %161, %160, %cst_52 {dimension_numbers = #tpu.dot_dimension_numbers<[1], [0], [0], [1], [0, 0, 1, 1], [], []>} : vector<32x32xbf16>, vector<32x128xbf16>, vector<32x128xf32> -> vector<32x128xf32>
    %c0_53 = arith.constant 0 : index
    %c0_54 = arith.constant 0 : index
    %163 = vector.load %arg9[%c0_53, %c0_54] : memref<1x128xf32, #tpu.memory_space<vmem>>, vector<1x128xf32>
    %164 = vector.broadcast %163 : vector<1x128xf32> to vector<32x128xf32>
    %165 = arith.addf %162, %164 : vector<32x128xf32>
    %cst_55 = arith.constant 0.000000e+00 : f32
    %166 = vector.broadcast %cst_55 : f32 to vector<32x128xf32>
    %167 = arith.maximumf %165, %166 : vector<32x128xf32>
    %c0_56 = arith.constant 0 : index
    %c0_57 = arith.constant 0 : index
    %168 = vector.load %arg10[%c0_56, %c0_57] : memref<128x32xbf16, #tpu.memory_space<vmem>>, vector<128x32xbf16>
    %169 = arith.truncf %167 : vector<32x128xf32> to vector<32x128xbf16>
    %cst_58 = arith.constant dense<0.000000e+00> : vector<32x32xf32>
    %170 = tpu.matmul %169, %168, %cst_58 {dimension_numbers = #tpu.dot_dimension_numbers<[1], [0], [0], [1], [0, 0, 1, 1], [], []>} : vector<32x128xbf16>, vector<128x32xbf16>, vector<32x32xf32> -> vector<32x32xf32>
    %171 = arith.addf %159, %170 : vector<32x32xf32>
    %c0_59 = arith.constant 0 : index
    %c0_60 = arith.constant 0 : index
    %172 = vector.load %arg11[%c0_59, %c0_60] : memref<1x32xf32, #tpu.memory_space<vmem>>, vector<1x32xf32>
    %173 = vector.broadcast %172 : vector<1x32xf32> to vector<32x32xf32>
    %174 = arith.addf %171, %173 : vector<32x32xf32>
    %175 = vector.shape_cast %174 : vector<32x32xf32> to vector<16x2x32xf32>
    %176 = vector.extract_strided_slice %175 {offsets = [0, 0, 0], sizes = [8, 2, 32], strides = [1, 1, 1]} : vector<16x2x32xf32> to vector<8x2x32xf32>
    %c0_61 = arith.constant 0 : index
    %c0_62 = arith.constant 0 : index
    %c0_63 = arith.constant 0 : index
    %177 = vector.load %arg12[%c0_61, %c0_62, %c0_63] : memref<8x2x32xf32, #tpu.memory_space<vmem>>, vector<8x2x32xf32>
    tpu.vector_store %arg12[%c0_61, %c0_62, %c0_63], %176 {strides = array<i32>} : memref<8x2x32xf32, #tpu.memory_space<vmem>>, vector<8x2x32xf32>,
    %178 = vector.extract_strided_slice %175 {offsets = [8, 0, 0], sizes = [8, 2, 32], strides = [1, 1, 1]} : vector<16x2x32xf32> to vector<8x2x32xf32>
    %c0_64 = arith.constant 0 : index
    %c0_65 = arith.constant 0 : index
    %c0_66 = arith.constant 0 : index
    %179 = vector.load %arg13[%c0_64, %c0_65, %c0_66] : memref<8x2x32xf32, #tpu.memory_space<vmem>>, vector<8x2x32xf32>
    tpu.vector_store %arg13[%c0_64, %c0_65, %c0_66], %178 {strides = array<i32>} : memref<8x2x32xf32, #tpu.memory_space<vmem>>, vector<8x2x32xf32>,
    return
  }
}

</mosaic_0001>

<llo_original>
// kernel: vlsa_adapter.1
$region0: #{vlsa_adapter.1}
  #allocation0 [shape = 'u32[]', space=smem, size = 0x4, offset = 0x4, fixed_abs, tag = 'smem constant byte address 0x4 - core index']
  #allocation1 [shape = 'u32[144,128]{1,0:T(1,128)}', space=vmem, size = 0x12000, scoped, tag = 'internal scratch']
  %s0 = inlined_call_operand.vmem [shape: f32[8,2,32], index: 0, kind: input, shape index: {}]
  %s1 = inlined_call_operand.vmem [shape: f32[8,2,32], index: 1, kind: input, shape index: {}]
  %s2 = inlined_call_operand.vmem [shape: bf16[32,96], index: 2, kind: input, shape index: {}]
  %s3 = inlined_call_operand.hbm [shape: f32[1,96], index: 3, kind: input, shape index: {}]
  %s4 = inlined_call_operand.vmem [shape: bf16[32,32], index: 4, kind: input, shape index: {}]
  %s5 = inlined_call_operand.hbm [shape: f32[1,32], index: 5, kind: input, shape index: {}]
  %s6 = inlined_call_operand.hbm [shape: f32[1,32], index: 6, kind: input, shape index: {}]
  %s7 = inlined_call_operand.hbm [shape: f32[1,32], index: 7, kind: input, shape index: {}]
  %s8 = inlined_call_operand.vmem [shape: bf16[32,128], index: 8, kind: input, shape index: {}]
  %s9 = inlined_call_operand.hbm [shape: f32[1,128], index: 9, kind: input, shape index: {}]
  %s10 = inlined_call_operand.vmem [shape: bf16[128,32], index: 10, kind: input, shape index: {}]
  %s11 = inlined_call_operand.hbm [shape: f32[1,32], index: 11, kind: input, shape index: {}]
  %s12 = inlined_call_operand.hbm [shape: f32[8,2,32], index: 12, kind: output, shape index: {0}]
  %s13 = inlined_call_operand.hbm [shape: f32[8,2,32], index: 13, kind: output, shape index: {1}]
  %14 = xla_tuple %s12, %s13
  %s15 = sld [smem:[#allocation0]]
  $region90: #{vlsa_adapter.1} parent=0
    _
  %s17 = ssub.s32 1, %s15
  %s18 = scalar_select 0, %s17, %s15
  $region1: #{vlsa_adapter.1} parent=0
    #allocation2 [shape = 'u8[512]{0}', space=vmem, size = 0x400, scoped, tag = 'input window, operand 3, single buffered']
    #allocation3 [shape = 's32[1]{0}', space=sflag, size = 0x4, scoped, tag = 'scoped memory for vlsa_adapter.1']
    #allocation4 [shape = 's32[1]{0}', space=sflag, size = 0x4, scoped, tag = 'scoped memory for vlsa_adapter.1']
    #allocation5 [shape = 'u8[512]{0}', space=vmem, size = 0x400, scoped, tag = 'input window, operand 5, single buffered']
    #allocation6 [shape = 's32[1]{0}', space=sflag, size = 0x4, scoped, tag = 'scoped memory for vlsa_adapter.1']
    #allocation7 [shape = 'u8[512]{0}', space=vmem, size = 0x400, scoped, tag = 'input window, operand 6, single buffered']
    #allocation8 [shape = 'u8[512]{0}', space=vmem, size = 0x400, scoped, tag = 'input window, operand 7, single buffered']
    #allocation9 [shape = 's32[1]{0}', space=sflag, size = 0x4, scoped, tag = 'scoped memory for vlsa_adapter.1']
    #allocation10 [shape = 'u8[512]{0}', space=vmem, size = 0x400, scoped, tag = 'input window, operand 9, single buffered']
    #allocation11 [shape = 'u8[512]{0}', space=vmem, size = 0x400, scoped, tag = 'input window, operand 11, single buffered']
    #allocation12 [shape = 's32[1]{0}', space=sflag, size = 0x4, scoped, tag = 'scoped memory for vlsa_adapter.1']
    #allocation13 [shape = 'u8[8192]{0}', space=vmem, size = 0x2000, scoped, tag = 'output window, operand 0, single buffered']
    #allocation14 [shape = 'u8[8192]{0}', space=vmem, size = 0x2000, scoped, tag = 'output window, operand 1, single buffered']
    #allocation15 [shape = 's32[1]{0}', space=sflag, size = 0x4, scoped, tag = 'scoped memory for vlsa_adapter.1']
    %19 = vsyncpa [#allocation3], 0
    %20 = vsyncpa [#allocation6], 0
    %21 = vsyncpa [#allocation9], 0
    %22 = vsyncpa [#allocation12], 0
    %23 = vsyncpa [#allocation4], 0
    %24 = vsyncpa [#allocation15], 0
    // Predicated region
    $region2: #{vlsa_adapter.1} parent=1 // pred_check
      _
    $region3: #{vlsa_adapter.1} parent=1 // pred_check_branch
      %26 = sbr.rel (0) target = $region5
    $region4: #{vlsa_adapter.1} parent=1 // pred_region
      _
    $region5: #{vlsa_adapter.1} parent=1 // pred_fallthru
      _
    // Predicated region
    $region6: #{vlsa_adapter.1} parent=1 // pred_check
      _
    $region7: #{vlsa_adapter.1} parent=1 // pred_check_branch
      %28 = sbr.rel (0) target = $region9
    $region8: #{vlsa_adapter.1} parent=1 // pred_region
      _
    $region9: #{vlsa_adapter.1} parent=1 // pred_fallthru
      _
    // Predicated region
    $region10: #{vlsa_adapter.1} parent=1 // pred_check
      _
    $region11: #{vlsa_adapter.1} parent=1 // pred_check_branch
      %30 = sbr.rel (0) target = $region13
    $region12: #{vlsa_adapter.1} parent=1 // pred_region
      _
    $region13: #{vlsa_adapter.1} parent=1 // pred_fallthru
      _
    // Predicated region
    $region14: #{vlsa_adapter.1} parent=1 // pred_check
      _
    $region15: #{vlsa_adapter.1} parent=1 // pred_check_branch
      %32 = sbr.rel (0) target = $region17
    $region16: #{vlsa_adapter.1} parent=1 // pred_region
      %s34 = ssub.s32 16, 16
      %35 = vsyncadd [#allocation3], %s34
      %s37 = sshll.u32 [#allocation2], 4
      %s38 = int_to_ptr.vmem [resolvable:$true] %s37
      %40 = dma.hbm_to_vmem [thread:$0]  %s3, 16, %s38, [#allocation3]
    $region17: #{vlsa_adapter.1} parent=1 // pred_fallthru
      _
    // Predicated region
    $region18: #{vlsa_adapter.1} parent=1 // pred_check
      _
    $region19: #{vlsa_adapter.1} parent=1 // pred_check_branch
      %42 = sbr.rel (0) target = $region21
    $region20: #{vlsa_adapter.1} parent=1 // pred_region
      _
    $region21: #{vlsa_adapter.1} parent=1 // pred_fallthru
      _
    // Predicated region
    $region22: #{vlsa_adapter.1} parent=1 // pred_check
      _
    $region23: #{vlsa_adapter.1} parent=1 // pred_check_branch
      %44 = sbr.rel (0) target = $region25
    $region24: #{vlsa_adapter.1} parent=1 // pred_region
      %s46 = ssub.s32 16, 16
      %47 = vsyncadd [#allocation6], %s46
      %s49 = sshll.u32 [#allocation5], 4
      %s50 = int_to_ptr.vmem [resolvable:$true] %s49
      %52 = dma.hbm_to_vmem [thread:$0]  %s5, 16, %s50, [#allocation6]
    $region25: #{vlsa_adapter.1} parent=1 // pred_fallthru
      _
    // Predicated region
    $region26: #{vlsa_adapter.1} parent=1 // pred_check
      _
    $region27: #{vlsa_adapter.1} parent=1 // pred_check_branch
      %54 = sbr.rel (0) target = $region29
    $region28: #{vlsa_adapter.1} parent=1 // pred_region
      %s56 = ssub.s32 16, 16
      %57 = vsyncadd [#allocation6], %s56
      %s59 = sshll.u32 [#allocation7], 4
      %s60 = int_to_ptr.vmem [resolvable:$true] %s59
      %62 = dma.hbm_to_vmem [thread:$0]  %s6, 16, %s60, [#allocation6]
    $region29: #{vlsa_adapter.1} parent=1 // pred_fallthru
      _
    // Predicated region
    $region30: #{vlsa_adapter.1} parent=1 // pred_check
      _
    $region31: #{vlsa_adapter.1} parent=1 // pred_check_branch
      %64 = sbr.rel (0) target = $region33
    $region32: #{vlsa_adapter.1} parent=1 // pred_region
      %s66 = ssub.s32 16, 16
      %67 = vsyncadd [#allocation9], %s66
      %s69 = sshll.u32 [#allocation8], 4
      %s70 = int_to_ptr.vmem [resolvable:$true] %s69
      %72 = dma.hbm_to_vmem [thread:$0]  %s7, 16, %s70, [#allocation9]
    $region33: #{vlsa_adapter.1} parent=1 // pred_fallthru
      _
    // Predicated region
    $region34: #{vlsa_adapter.1} parent=1 // pred_check
      _
    $region35: #{vlsa_adapter.1} parent=1 // pred_check_branch
      %74 = sbr.rel (0) target = $region37
    $region36: #{vlsa_adapter.1} parent=1 // pred_region
      _
    $region37: #{vlsa_adapter.1} parent=1 // pred_fallthru
      _
    // Predicated region
    $region38: #{vlsa_adapter.1} parent=1 // pred_check
      _
    $region39: #{vlsa_adapter.1} parent=1 // pred_check_branch
      %76 = sbr.rel (0) target = $region41
    $region40: #{vlsa_adapter.1} parent=1 // pred_region
      %s78 = ssub.s32 16, 16
      %79 = vsyncadd [#allocation9], %s78
      %s81 = sshll.u32 [#allocation10], 4
      %s82 = int_to_ptr.vmem [resolvable:$true] %s81
      %84 = dma.hbm_to_vmem [thread:$0]  %s9, 16, %s82, [#allocation9]
    $region41: #{vlsa_adapter.1} parent=1 // pred_fallthru
      _
    // Predicated region
    $region42: #{vlsa_adapter.1} parent=1 // pred_check
      _
    $region43: #{vlsa_adapter.1} parent=1 // pred_check_branch
      %86 = sbr.rel (0) target = $region45
    $region44: #{vlsa_adapter.1} parent=1 // pred_region
      _
    $region45: #{vlsa_adapter.1} parent=1 // pred_fallthru
      _
    // Predicated region
    $region46: #{vlsa_adapter.1} parent=1 // pred_check
      _
    $region47: #{vlsa_adapter.1} parent=1 // pred_check_branch
      %88 = sbr.rel (0) target = $region49
    $region48: #{vlsa_adapter.1} parent=1 // pred_region
      %s90 = ssub.s32 16, 16
      %91 = vsyncadd [#allocation12], %s90
      %s93 = sshll.u32 [#allocation11], 4
      %s94 = int_to_ptr.vmem [resolvable:$true] %s93
      %96 = dma.hbm_to_vmem [thread:$0]  %s11, 16, %s94, [#allocation12]
    $region49: #{vlsa_adapter.1} parent=1 // pred_fallthru
      _
    // Predicated region
    $region50: #{vlsa_adapter.1} parent=1 // pred_check
      _
    $region51: #{vlsa_adapter.1} parent=1 // pred_check_branch
      %98 = sbr.rel (0) target = $region53
    $region52: #{vlsa_adapter.1} parent=1 // pred_region
      %99 = dma.done [#allocation3], 16
    $region53: #{vlsa_adapter.1} parent=1 // pred_fallthru
      _
    // Predicated region
    $region54: #{vlsa_adapter.1} parent=1 // pred_check
      _
    $region55: #{vlsa_adapter.1} parent=1 // pred_check_branch
      %101 = sbr.rel (0) target = $region57
    $region56: #{vlsa_adapter.1} parent=1 // pred_region
      %102 = dma.done [#allocation6], 16
    $region57: #{vlsa_adapter.1} parent=1 // pred_fallthru
      _
    // Predicated region
    $region58: #{vlsa_adapter.1} parent=1 // pred_check
      _
    $region59: #{vlsa_adapter.1} parent=1 // pred_check_branch
      %104 = sbr.rel (0) target = $region61
    $region60: #{vlsa_adapter.1} parent=1 // pred_region
      %105 = dma.done [#allocation6], 16
    $region61: #{vlsa_adapter.1} parent=1 // pred_fallthru
      _
    // Predicated region
    $region62: #{vlsa_adapter.1} parent=1 // pred_check
      _
    $region63: #{vlsa_adapter.1} parent=1 // pred_check_branch
      %107 = sbr.rel (0) target = $region65
    $region64: #{vlsa_adapter.1} parent=1 // pred_region
      %108 = dma.done [#allocation9], 16
    $region65: #{vlsa_adapter.1} parent=1 // pred_fallthru
      _
    // Predicated region
    $region66: #{vlsa_adapter.1} parent=1 // pred_check
      _
    $region67: #{vlsa_adapter.1} parent=1 // pred_check_branch
      %110 = sbr.rel (0) target = $region69
    $region68: #{vlsa_adapter.1} parent=1 // pred_region
      %111 = dma.done [#allocation9], 16
    $region69: #{vlsa_adapter.1} parent=1 // pred_fallthru
      _
    // Predicated region
    $region70: #{vlsa_adapter.1} parent=1 // pred_check
      _
    $region71: #{vlsa_adapter.1} parent=1 // pred_check_branch
      %113 = sbr.rel (0) target = $region73
    $region72: #{vlsa_adapter.1} parent=1 // pred_region
      %114 = dma.done [#allocation12], 16
    $region73: #{vlsa_adapter.1} parent=1 // pred_fallthru
      _
    %v116 = vld [vmem:[%s0] sm:$0x3]
    %v117 = vld [vmem:[%s0 + $0x2] sm:$0x3]
    %v118 = vld [vmem:[%s0 + $0x4] sm:$0x3]
    %v119 = vld [vmem:[%s0 + $0x6] sm:$0x3]
    %v120 = vld [vmem:[%s0 + $0x8] sm:$0x3]
    %v121 = vld [vmem:[%s0 + $0xa] sm:$0x3]
    %v122 = vld [vmem:[%s0 + $0xc] sm:$0x3]
    %v123 = vld [vmem:[%s0 + $0xe] sm:$0x3]
    %v124 = vld [vmem:[%s1] sm:$0x3]
    %v125 = vld [vmem:[%s1 + $0x2] sm:$0x3]
    %v126 = vld [vmem:[%s1 + $0x4] sm:$0x3]
    %v127 = vld [vmem:[%s1 + $0x6] sm:$0x3]
    %v128 = vld [vmem:[%s1 + $0x8] sm:$0x3]
    %v129 = vld [vmem:[%s1 + $0xa] sm:$0x3]
    %v130 = vld [vmem:[%s1 + $0xc] sm:$0x3]
    %v131 = vld [vmem:[%s1 + $0xe] sm:$0x3]
    %v148 = vcombine.low %v116, %v117
    %v149 = vcombine.low %v118, %v119
    %v151 = vunpack.c.l.s4 1983009808
    %v152 = vunpack.c.0.s8 %v151
    %v153 = vlaneseq
    %v154 = vshrl.u32 %v153, 7
    %v155 = vsub.s32 %v152, %v154
    %v156 = vrot.slane %v148, %v155
    %v158 = vunpack.c.l.s4 1983009808
    %v159 = vunpack.c.0.s8 %v158
    %v160 = vlaneseq
    %v161 = vshrl.u32 %v160, 7
    %v162 = vsub.s32 %v159, %v161
    %v163 = vrot.slane %v149, %v162
    %v164 = vcombine.low %v156, %v163
    %v165 = vcombine.low %v120, %v121
    %v166 = vcombine.low %v122, %v123
    %v168 = vunpack.c.l.s4 1983009808
    %v169 = vunpack.c.0.s8 %v168
    %v170 = vlaneseq
    %v171 = vshrl.u32 %v170, 7
    %v172 = vsub.s32 %v169, %v171
    %v173 = vrot.slane %v165, %v172
    %v175 = vunpack.c.l.s4 1983009808
    %v176 = vunpack.c.0.s8 %v175
    %v177 = vlaneseq
    %v178 = vshrl.u32 %v177, 7
    %v179 = vsub.s32 %v176, %v178
    %v180 = vrot.slane %v166, %v179
    %v181 = vcombine.low %v173, %v180
    %v182 = vcombine.low %v124, %v125
    %v183 = vcombine.low %v126, %v127
    %v185 = vunpack.c.l.s4 1983009808
    %v186 = vunpack.c.0.s8 %v185
    %v187 = vlaneseq
    %v188 = vshrl.u32 %v187, 7
    %v189 = vsub.s32 %v186, %v188
    %v190 = vrot.slane %v182, %v189
    %v192 = vunpack.c.l.s4 1983009808
    %v193 = vunpack.c.0.s8 %v192
    %v194 = vlaneseq
    %v195 = vshrl.u32 %v194, 7
    %v196 = vsub.s32 %v193, %v195
    %v197 = vrot.slane %v183, %v196
    %v198 = vcombine.low %v190, %v197
    %v199 = vcombine.low %v128, %v129
    %v200 = vcombine.low %v130, %v131
    %v202 = vunpack.c.l.s4 1983009808
    %v203 = vunpack.c.0.s8 %v202
    %v204 = vlaneseq
    %v205 = vshrl.u32 %v204, 7
    %v206 = vsub.s32 %v203, %v205
    %v207 = vrot.slane %v199, %v206
    %v209 = vunpack.c.l.s4 1983009808
    %v210 = vunpack.c.0.s8 %v209
    %v211 = vlaneseq
    %v212 = vshrl.u32 %v211, 7
    %v213 = vsub.s32 %v210, %v212
    %v214 = vrot.slane %v200, %v213
    %v215 = vcombine.low %v207, %v214
    %v220 = vpack.c.bf16 %v181, %v164
    %v221 = vpack.c.bf16 %v215, %v198
    %v222 = vlaneseq
    %v223 = vshrl.u32 %v222, 7
    %v224 = vadd.s32 %v223, 8
    %v225 = vadd.s32 %v223, 16
    %v226 = vadd.s32 %v223, 24
    %v227 = vlaneseq
    %v228 = vand.u32 %v227, 127
    %vm229 = vcmp.lt.s32.totalorder %v223, 0
    %v230 = vsub.s32 0, %v223
    %v231 = vsel %vm229, %v230, %v223
    %v232 = vshrl.u32 %v231, 1
    %v233 = vand.u32 %v231, 1
    %v234 = vsub.s32 0, %v233
    %v235 = vsel %vm229, %v234, %v233
    %vm236 = vcmp.lt.s32.totalorder %v224, 0
    %v237 = vsub.s32 0, %v224
    %v238 = vsel %vm236, %v237, %v224
    %v239 = vshrl.u32 %v238, 1
    %v240 = vand.u32 %v238, 1
    %v241 = vsub.s32 0, %v240
    %v242 = vsel %vm236, %v241, %v240
    %vm243 = vcmp.lt.s32.totalorder %v225, 0
    %v244 = vsub.s32 0, %v225
    %v245 = vsel %vm243, %v244, %v225
    %v246 = vshrl.u32 %v245, 1
    %v247 = vand.u32 %v245, 1
    %v248 = vsub.s32 0, %v247
    %v249 = vsel %vm243, %v248, %v247
    %vm250 = vcmp.lt.s32.totalorder %v226, 0
    %v251 = vsub.s32 0, %v226
    %v252 = vsel %vm250, %v251, %v226
    %v253 = vshrl.u32 %v252, 1
    %v254 = vand.u32 %v252, 1
    %v255 = vsub.s32 0, %v254
    %v256 = vsel %vm250, %v255, %v254
    %vm257 = vcmp.ne.s32.totalorder %v235, 0
    %vm258 = vcmp.ne.s32.totalorder %v242, 0
    %vm259 = vcmp.ne.s32.totalorder %v249, 0
    %vm260 = vcmp.ne.s32.totalorder %v256, 0
    %vm261 = vcmp.lt.s32.totalorder %v235, 0
    %vm262 = vcmp.lt.s32.totalorder %v242, 0
    %vm263 = vcmp.lt.s32.totalorder %v249, 0
    %vm264 = vcmp.lt.s32.totalorder %v256, 0
    %vm265 = vmand %vm261, %vm257
    %vm266 = vmand %vm262, %vm258
    %vm267 = vmand %vm263, %vm259
    %vm268 = vmand %vm264, %vm260
    %v269 = vadd.s32 %v235, 2
    %v270 = vadd.s32 %v242, 2
    %v271 = vadd.s32 %v249, 2
    %v272 = vadd.s32 %v256, 2
    %v273 = vsel %vm265, %v269, %v235
    %v274 = vsel %vm266, %v270, %v242
    %v275 = vsel %vm267, %v271, %v249
    %v276 = vsel %vm268, %v272, %v256
    %vm277 = vcmp.lt.s32.totalorder %v228, 0
    %v278 = vsub.s32 0, %v228
    %v279 = vsel %vm277, %v278, %v228
    %v280 = vshrl.u32 %v279, 1
    %v281 = vand.u32 %v279, 1
    %v282 = vsub.s32 0, %v281
    %v283 = vsel %vm277, %v282, %v281
    %vm284 = vcmp.ne.s32.totalorder %v283, 0
    %vm285 = vcmp.lt.s32.totalorder %v283, 0
    %vm286 = vmand %vm285, %vm284
    %v287 = vadd.s32 %v283, 2
    %v288 = vsel %vm286, %v287, %v283
    %vm289 = vcmp.eq.s32.totalorder %v273, %v288
    %vm290 = vcmp.eq.s32.totalorder %v274, %v288
    %vm291 = vcmp.eq.s32.totalorder %v275, %v288
    %vm292 = vcmp.eq.s32.totalorder %v276, %v288
    %v293 = vsel %vm289, 0.0, -1e+09
    %v294 = vsel %vm290, 0.0, -1e+09
    %v295 = vsel %vm291, 0.0, -1e+09
    %v296 = vsel %vm292, 0.0, -1e+09
    %v297 = vld [vmem:[%s2] sm:$0xf]
    %v298 = vld [vmem:[%s2 + $0x4] sm:$0xf]
    %v299 = vld [vmem:[%s2 + $0x8] sm:$0xf]
    %v300 = vld [vmem:[%s2 + $0xc] sm:$0xf]
    %v301 = vld [vmem:[#allocation2] sm:$0x1]
    %v303 = vlaneseq
    %v304 = vshrl.u32 %v303, 7
    %v305 = vsub.s32 0, %v304
    %v306 = vrot.slane %v301, %v305
    %v312 = vunpack.c.l.b16 %v297
    %v313 = vunpack.c.l.b16 %v298
    %v314 = vunpack.c.l.b16 %v299
    %v315 = vunpack.c.l.b16 %v300
    %v316 = vpack.c.b16 %v313, %v312
    %v317 = vpack.c.b16 %v315, %v314
    %vm320 = vcmask 261120
    %v322 = vsel %vm320, %v220, 0
    %v325 = vsel %vm320, %v221, 0
    %327 = vmatprep.subr.bf16.mxu0 0
    %328 = vmatpush1.bf16.msra.mxu0 0
    %329 = vmatprep.subr.bf16.mxu0 0
    %330 = vmatpush1.bf16.msra.mxu0 0
    %331 = vmatprep.subr.bf16.mxu0 0
    %332 = vmatpush1.bf16.msra.mxu0 0
    %333 = vmatprep.subr.bf16.mxu0 0
    %334 = vmatpush1.bf16.msra.mxu0 0
    %335 = vmatprep.subr.bf16.mxu0 0
    %336 = vmatpush1.bf16.msra.mxu0 0
    %337 = vmatprep.subr.bf16.mxu0 0
    %338 = vmatpush1.bf16.msra.mxu0 0
    %339 = vmatprep.subr.bf16.mxu0 0
    %340 = vmatpush1.bf16.msra.mxu0 %v317
    %341 = vmatprep.subr.bf16.mxu0 0
    %342 = vmatpush1.bf16.msra.mxu0 %v316
    %343 = vmatprep.subr.bf16.mxu0 0
    %344 = vmatpush2.bf16.msra.mxu0 0
    %345 = vmatprep.subr.bf16.mxu0 0
    %346 = vmatpush2.bf16.msra.mxu0 0
    %347 = vmatprep.subr.bf16.mxu0 0
    %348 = vmatpush2.bf16.msra.mxu0 0
    %349 = vmatprep.subr.bf16.mxu0 0
    %350 = vmatpush2.bf16.msra.mxu0 0
    %351 = vmatprep.subr.bf16.mxu0 0
    %352 = vmatpush2.bf16.msra.mxu0 0
    %353 = vmatprep.subr.bf16.mxu0 0
    %354 = vmatpush2.bf16.msra.mxu0 0
    %355 = vmatprep.subr.bf16.mxu0 0
    %356 = vmatpush2.bf16.msra.mxu0 0
    %357 = vmatprep.subr.bf16.mxu0 0
    %358 = vmatpush2.bf16.msra.mxu0 0
    %359 = vmatprep.mubr.bf16.mxu0 0
    %360 = vmatmul.mubr.bf16.gmra.mxu0 %v322
    %v361 = vpop.f32.mrf.mxu0
    %v362 = vadd.f32 %v306, %v361
    %v363 = vpop.f32.mrf.mxu0
    %v364 = vpop.f32.mrf.mxu0
    %v365 = vadd.f32 %v306, %v364
    %v366 = vpop.f32.mrf.mxu0
    %367 = vmatprep.mubr.bf16.mxu0 0
    %368 = vmatmul.mubr.bf16.gmra.mxu0 %v325
    %v369 = vpop.f32.mrf.mxu0
    %v370 = vadd.f32 %v306, %v369
    %v371 = vpop.f32.mrf.mxu0
    %v372 = vpop.f32.mrf.mxu0
    %v373 = vadd.f32 %v306, %v372
    %v374 = vpop.f32.mrf.mxu0
    %375 = vdwg.mxu0
    %v376 = vpack.c.bf16 %v365, %v362
    %v377 = vpack.c.bf16 %v373, %v370
    %380 = vrot.lane.b32.xlu0 %v376, 96
    %v381 = vpop.permute.xlu0 %380
    %382 = vrot.lane.b32.xlu0 %v377, 96
    %v383 = vpop.permute.xlu0 %382
    %vm384 = vcmask 64512
    %v386 = vsel %vm384, %v376, 0
    %v389 = vsel %vm384, %v377, 0
    %v392 = vsel %vm384, %v381, 0
    %v395 = vsel %vm384, %v383, 0
    %397 = vmatprep.subr.bf16.mxu0 0
    %398 = vmatpush1.bf16.xpose.msra.mxu0 0
    %399 = vmatprep.subr.bf16.mxu0 0
    %400 = vmatpush1.bf16.xpose.msra.mxu0 0
    %401 = vmatprep.subr.bf16.mxu0 0
    %402 = vmatpush1.bf16.xpose.msra.mxu0 0
    %403 = vmatprep.subr.bf16.mxu0 0
    %404 = vmatpush1.bf16.xpose.msra.mxu0 0
    %405 = vmatprep.subr.bf16.mxu0 0
    %406 = vmatpush1.bf16.xpose.msra.mxu0 0
    %407 = vmatprep.subr.bf16.mxu0 0
    %408 = vmatpush1.bf16.xpose.msra.mxu0 0
    %409 = vmatprep.subr.bf16.mxu0 0
    %410 = vmatpush1.bf16.xpose.msra.mxu0 %v395
    %411 = vmatprep.subr.bf16.mxu0 0
    %412 = vmatpush1.bf16.xpose.msra.mxu0 %v392
    %413 = vmatprep.subr.bf16.mxu0 0
    %414 = vmatpush2.bf16.xpose.msra.mxu0 0
    %415 = vmatprep.subr.bf16.mxu0 0
    %416 = vmatpush2.bf16.xpose.msra.mxu0 0
    %417 = vmatprep.subr.bf16.mxu0 0
    %418 = vmatpush2.bf16.xpose.msra.mxu0 0
    %419 = vmatprep.subr.bf16.mxu0 0
    %420 = vmatpush2.bf16.xpose.msra.mxu0 0
    %421 = vmatprep.subr.bf16.mxu0 0
    %422 = vmatpush2.bf16.xpose.msra.mxu0 0
    %423 = vmatprep.subr.bf16.mxu0 0
    %424 = vmatpush2.bf16.xpose.msra.mxu0 0
    %425 = vmatprep.subr.bf16.mxu0 0
    %426 = vmatpush2.bf16.xpose.msra.mxu0 0
    %427 = vmatprep.subr.bf16.mxu0 0
    %428 = vmatpush2.bf16.xpose.msra.mxu0 0
    %429 = vmatprep.mubr.bf16.mxu0 0
    %430 = vmatmul.mubr.bf16.gmra.mxu0 %v386
    %v431 = vpop.f32.mrf.mxu0
    %v432 = vadd.f32 %v293, %v431
    %v433 = vpop.f32.mrf.mxu0
    %v434 = vpop.f32.mrf.mxu0
    %v435 = vadd.f32 %v294, %v434
    %v436 = vpop.f32.mrf.mxu0
    %437 = vmatprep.mubr.bf16.mxu0 0
    %438 = vmatmul.mubr.bf16.gmra.mxu0 %v389
    %v439 = vpop.f32.mrf.mxu0
    %v440 = vadd.f32 %v295, %v439
    %v441 = vpop.f32.mrf.mxu0
    %v442 = vpop.f32.mrf.mxu0
    %v443 = vadd.f32 %v296, %v442
    %v444 = vpop.f32.mrf.mxu0
    %445 = vdwg.mxu0
    %v446 = vsel %vm320, %v432, -inf
    %447 = vmax.xlane.f32.xlu0 %v446
    %v448 = vpop.xlane.xlu0 %447
    %v449 = vsel %vm320, %v435, -inf
    %450 = vmax.xlane.f32.xlu0 %v449
    %v451 = vpop.xlane.xlu0 %450
    %v452 = vsel %vm320, %v440, -inf
    %453 = vmax.xlane.f32.xlu0 %v452
    %v454 = vpop.xlane.xlu0 %453
    %v455 = vsel %vm320, %v443, -inf
    %456 = vmax.xlane.f32.xlu0 %v455
    %v457 = vpop.xlane.xlu0 %456
    %v458 = vsub.f32 %v432, %v448
    %v459 = vsub.f32 %v435, %v451
    %v460 = vsub.f32 %v440, %v454
    %v461 = vsub.f32 %v443, %v457
    %v462 = vmul.f32 %v458, 1.442695
    %v463 = vpow.pop %v462
    %v464 = vmul.f32 %v459, 1.442695
    %v465 = vpow.pop %v464
    %v466 = vmul.f32 %v460, 1.442695
    %v467 = vpow.pop %v466
    %v468 = vmul.f32 %v461, 1.442695
    %v469 = vpow.pop %v468
    %v470 = vsel %vm320, %v463, 0.0
    %471 = vadd.xlane.f32.xlu0 %v470
    %v472 = vpop.xlane.xlu0 %471
    %v473 = vsel %vm320, %v465, 0.0
    %474 = vadd.xlane.f32.xlu0 %v473
    %v475 = vpop.xlane.xlu0 %474
    %v476 = vsel %vm320, %v467, 0.0
    %477 = vadd.xlane.f32.xlu0 %v476
    %v478 = vpop.xlane.xlu0 %477
    %v479 = vsel %vm320, %v469, 0.0
    %480 = vadd.xlane.f32.xlu0 %v479
    %v481 = vpop.xlane.xlu0 %480
    %v482 = vrcp.pop %v472
    %v483 = vrcp.pop %v475
    %v484 = vrcp.pop %v478
    %v485 = vrcp.pop %v481
    %v486 = vmul.f32 %v463, %v482
    %v487 = vmul.f32 %v465, %v483
    %v488 = vmul.f32 %v467, %v484
    %v489 = vmul.f32 %v469, %v485
    %v490 = vpack.c.bf16 %v487, %v486
    %v491 = vpack.c.bf16 %v489, %v488
    %492 = vrot.lane.b32.xlu0 %v376, 64
    %v493 = vpop.permute.xlu0 %492
    %494 = vrot.lane.b32.xlu0 %v377, 64
    %v495 = vpop.permute.xlu0 %494
    %v499 = vsel %vm320, %v490, 0
    %v502 = vsel %vm320, %v491, 0
    %504 = vmatprep.subr.bf16.mxu0 0
    %505 = vmatpush1.bf16.msra.mxu0 0
    %506 = vmatprep.subr.bf16.mxu0 0
    %507 = vmatpush1.bf16.msra.mxu0 0
    %508 = vmatprep.subr.bf16.mxu0 0
    %509 = vmatpush1.bf16.msra.mxu0 0
    %510 = vmatprep.subr.bf16.mxu0 0
    %511 = vmatpush1.bf16.msra.mxu0 0
    %512 = vmatprep.subr.bf16.mxu0 0
    %513 = vmatpush1.bf16.msra.mxu0 0
    %514 = vmatprep.subr.bf16.mxu0 0
    %515 = vmatpush1.bf16.msra.mxu0 0
    %516 = vmatprep.subr.bf16.mxu0 0
    %517 = vmatpush1.bf16.msra.mxu0 %v495
    %518 = vmatprep.subr.bf16.mxu0 0
    %519 = vmatpush1.bf16.msra.mxu0 %v493
    %520 = vmatprep.subr.bf16.mxu0 0
    %521 = vmatpush2.bf16.msra.mxu0 0
    %522 = vmatprep.subr.bf16.mxu0 0
    %523 = vmatpush2.bf16.msra.mxu0 0
    %524 = vmatprep.subr.bf16.mxu0 0
    %525 = vmatpush2.bf16.msra.mxu0 0
    %526 = vmatprep.subr.bf16.mxu0 0
    %527 = vmatpush2.bf16.msra.mxu0 0
    %528 = vmatprep.subr.bf16.mxu0 0
    %529 = vmatpush2.bf16.msra.mxu0 0
    %530 = vmatprep.subr.bf16.mxu0 0
    %531 = vmatpush2.bf16.msra.mxu0 0
    %532 = vmatprep.subr.bf16.mxu0 0
    %533 = vmatpush2.bf16.msra.mxu0 0
    %534 = vmatprep.subr.bf16.mxu0 0
    %535 = vmatpush2.bf16.msra.mxu0 0
    %536 = vmatprep.mubr.bf16.mxu0 0
    %537 = vmatmul.mubr.bf16.gmra.mxu0 %v499
    %v538 = vpop.f32.mrf.mxu0
    %v539 = vadd.f32 0.0, %v538
    %v540 = vpop.f32.mrf.mxu0
    %v541 = vpop.f32.mrf.mxu0
    %v542 = vadd.f32 0.0, %v541
    %v543 = vpop.f32.mrf.mxu0
    %544 = vmatprep.mubr.bf16.mxu0 0
    %545 = vmatmul.mubr.bf16.gmra.mxu0 %v502
    %v546 = vpop.f32.mrf.mxu0
    %v547 = vadd.f32 0.0, %v546
    %v548 = vpop.f32.mrf.mxu0
    %v549 = vpop.f32.mrf.mxu0
    %v550 = vadd.f32 0.0, %v549
    %v551 = vpop.f32.mrf.mxu0
    %552 = vdwg.mxu0
    %553 = vrot.lane.b32.xlu0 %v376, 120
    %v554 = vpop.permute.xlu0 %553
    %555 = vrot.lane.b32.xlu0 %v377, 120
    %v556 = vpop.permute.xlu0 %555
    %557 = vrot.lane.b32.xlu0 %v376, 88
    %v558 = vpop.permute.xlu0 %557
    %559 = vrot.lane.b32.xlu0 %v377, 88
    %v560 = vpop.permute.xlu0 %559
    %v562 = vsel %vm384, %v554, 0
    %v565 = vsel %vm384, %v556, 0
    %v568 = vsel %vm384, %v558, 0
    %v571 = vsel %vm384, %v560, 0
    %573 = vmatprep.subr.bf16.mxu0 0
    %574 = vmatpush1.bf16.xpose.msra.mxu0 0
    %575 = vmatprep.subr.bf16.mxu0 0
    %576 = vmatpush1.bf16.xpose.msra.mxu0 0
    %577 = vmatprep.subr.bf16.mxu0 0
    %578 = vmatpush1.bf16.xpose.msra.mxu0 0
    %579 = vmatprep.subr.bf16.mxu0 0
    %580 = vmatpush1.bf16.xpose.msra.mxu0 0
    %581 = vmatprep.subr.bf16.mxu0 0
    %582 = vmatpush1.bf16.xpose.msra.mxu0 0
    %583 = vmatprep.subr.bf16.mxu0 0
    %584 = vmatpush1.bf16.xpose.msra.mxu0 0
    %585 = vmatprep.subr.bf16.mxu0 0
    %586 = vmatpush1.bf16.xpose.msra.mxu0 %v571
    %587 = vmatprep.subr.bf16.mxu0 0
    %588 = vmatpush1.bf16.xpose.msra.mxu0 %v568
    %589 = vmatprep.subr.bf16.mxu0 0
    %590 = vmatpush2.bf16.xpose.msra.mxu0 0
    %591 = vmatprep.subr.bf16.mxu0 0
    %592 = vmatpush2.bf16.xpose.msra.mxu0 0
    %593 = vmatprep.subr.bf16.mxu0 0
    %594 = vmatpush2.bf16.xpose.msra.mxu0 0
    %595 = vmatprep.subr.bf16.mxu0 0
    %596 = vmatpush2.bf16.xpose.msra.mxu0 0
    %597 = vmatprep.subr.bf16.mxu0 0
    %598 = vmatpush2.bf16.xpose.msra.mxu0 0
    %599 = vmatprep.subr.bf16.mxu0 0
    %600 = vmatpush2.bf16.xpose.msra.mxu0 0
    %601 = vmatprep.subr.bf16.mxu0 0
    %602 = vmatpush2.bf16.xpose.msra.mxu0 0
    %603 = vmatprep.subr.bf16.mxu0 0
    %604 = vmatpush2.bf16.xpose.msra.mxu0 0
    %605 = vmatprep.mubr.bf16.mxu0 0
    %606 = vmatmul.mubr.bf16.gmra.mxu0 %v562
    %v607 = vpop.f32.mrf.mxu0
    %v608 = vadd.f32 %v293, %v607
    %v609 = vpop.f32.mrf.mxu0
    %v610 = vpop.f32.mrf.mxu0
    %v611 = vadd.f32 %v294, %v610
    %v612 = vpop.f32.mrf.mxu0
    %613 = vmatprep.mubr.bf16.mxu0 0
    %614 = vmatmul.mubr.bf16.gmra.mxu0 %v565
    %v615 = vpop.f32.mrf.mxu0
    %v616 = vadd.f32 %v295, %v615
    %v617 = vpop.f32.mrf.mxu0
    %v618 = vpop.f32.mrf.mxu0
    %v619 = vadd.f32 %v296, %v618
    %v620 = vpop.f32.mrf.mxu0
    %621 = vdwg.mxu0
    %v622 = vsel %vm320, %v608, -inf
    %623 = vmax.xlane.f32.xlu0 %v622
    %v624 = vpop.xlane.xlu0 %623
    %v625 = vsel %vm320, %v611, -inf
    %626 = vmax.xlane.f32.xlu0 %v625
    %v627 = vpop.xlane.xlu0 %626
    %v628 = vsel %vm320, %v616, -inf
    %629 = vmax.xlane.f32.xlu0 %v628
    %v630 = vpop.xlane.xlu0 %629
    %v631 = vsel %vm320, %v619, -inf
    %632 = vmax.xlane.f32.xlu0 %v631
    %v633 = vpop.xlane.xlu0 %632
    %v634 = vsub.f32 %v608, %v624
    %v635 = vsub.f32 %v611, %v627
    %v636 = vsub.f32 %v616, %v630
    %v637 = vsub.f32 %v619, %v633
    %v638 = vmul.f32 %v634, 1.442695
    %v639 = vpow.pop %v638
    %v640 = vmul.f32 %v635, 1.442695
    %v641 = vpow.pop %v640
    %v642 = vmul.f32 %v636, 1.442695
    %v643 = vpow.pop %v642
    %v644 = vmul.f32 %v637, 1.442695
    %v645 = vpow.pop %v644
    %v646 = vsel %vm320, %v639, 0.0
    %647 = vadd.xlane.f32.xlu0 %v646
    %v648 = vpop.xlane.xlu0 %647
    %v649 = vsel %vm320, %v641, 0.0
    %650 = vadd.xlane.f32.xlu0 %v649
    %v651 = vpop.xlane.xlu0 %650
    %v652 = vsel %vm320, %v643, 0.0
    %653 = vadd.xlane.f32.xlu0 %v652
    %v654 = vpop.xlane.xlu0 %653
    %v655 = vsel %vm320, %v645, 0.0
    %656 = vadd.xlane.f32.xlu0 %v655
    %v657 = vpop.xlane.xlu0 %656
    %v658 = vrcp.pop %v648
    %v659 = vrcp.pop %v651
    %v660 = vrcp.pop %v654
    %v661 = vrcp.pop %v657
    %v662 = vmul.f32 %v639, %v658
    %v663 = vmul.f32 %v641, %v659
    %v664 = vmul.f32 %v643, %v660
    %v665 = vmul.f32 %v645, %v661
    %v666 = vpack.c.bf16 %v663, %v662
    %v667 = vpack.c.bf16 %v665, %v664
    %668 = vrot.lane.b32.xlu0 %v376, 56
    %v669 = vpop.permute.xlu0 %668
    %670 = vrot.lane.b32.xlu0 %v377, 56
    %v671 = vpop.permute.xlu0 %670
    %v675 = vsel %vm320, %v666, 0
    %v678 = vsel %vm320, %v667, 0
    %680 = vmatprep.subr.bf16.mxu0 0
    %681 = vmatpush1.bf16.msra.mxu0 0
    %682 = vmatprep.subr.bf16.mxu0 0
    %683 = vmatpush1.bf16.msra.mxu0 0
    %684 = vmatprep.subr.bf16.mxu0 0
    %685 = vmatpush1.bf16.msra.mxu0 0
    %686 = vmatprep.subr.bf16.mxu0 0
    %687 = vmatpush1.bf16.msra.mxu0 0
    %688 = vmatprep.subr.bf16.mxu0 0
    %689 = vmatpush1.bf16.msra.mxu0 0
    %690 = vmatprep.subr.bf16.mxu0 0
    %691 = vmatpush1.bf16.msra.mxu0 0
    %692 = vmatprep.subr.bf16.mxu0 0
    %693 = vmatpush1.bf16.msra.mxu0 %v671
    %694 = vmatprep.subr.bf16.mxu0 0
    %695 = vmatpush1.bf16.msra.mxu0 %v669
    %696 = vmatprep.subr.bf16.mxu0 0
    %697 = vmatpush2.bf16.msra.mxu0 0
    %698 = vmatprep.subr.bf16.mxu0 0
    %699 = vmatpush2.bf16.msra.mxu0 0
    %700 = vmatprep.subr.bf16.mxu0 0
    %701 = vmatpush2.bf16.msra.mxu0 0
    %702 = vmatprep.subr.bf16.mxu0 0
    %703 = vmatpush2.bf16.msra.mxu0 0
    %704 = vmatprep.subr.bf16.mxu0 0
    %705 = vmatpush2.bf16.msra.mxu0 0
    %706 = vmatprep.subr.bf16.mxu0 0
    %707 = vmatpush2.bf16.msra.mxu0 0
    %708 = vmatprep.subr.bf16.mxu0 0
    %709 = vmatpush2.bf16.msra.mxu0 0
    %710 = vmatprep.subr.bf16.mxu0 0
    %711 = vmatpush2.bf16.msra.mxu0 0
    %712 = vmatprep.mubr.bf16.mxu0 0
    %713 = vmatmul.mubr.bf16.gmra.mxu0 %v675
    %v714 = vpop.f32.mrf.mxu0
    %v715 = vadd.f32 0.0, %v714
    %v716 = vpop.f32.mrf.mxu0
    %v717 = vpop.f32.mrf.mxu0
    %v718 = vadd.f32 0.0, %v717
    %v719 = vpop.f32.mrf.mxu0
    %720 = vmatprep.mubr.bf16.mxu0 0
    %721 = vmatmul.mubr.bf16.gmra.mxu0 %v678
    %v722 = vpop.f32.mrf.mxu0
    %v723 = vadd.f32 0.0, %v722
    %v724 = vpop.f32.mrf.mxu0
    %v725 = vpop.f32.mrf.mxu0
    %v726 = vadd.f32 0.0, %v725
    %v727 = vpop.f32.mrf.mxu0
    %728 = vdwg.mxu0
    %729 = vrot.lane.b32.xlu0 %v376, 112
    %v730 = vpop.permute.xlu0 %729
    %731 = vrot.lane.b32.xlu0 %v377, 112
    %v732 = vpop.permute.xlu0 %731
    %733 = vrot.lane.b32.xlu0 %v376, 80
    %v734 = vpop.permute.xlu0 %733
    %735 = vrot.lane.b32.xlu0 %v377, 80
    %v736 = vpop.permute.xlu0 %735
    %v738 = vsel %vm384, %v730, 0
    %v741 = vsel %vm384, %v732, 0
    %v744 = vsel %vm384, %v734, 0
    %v747 = vsel %vm384, %v736, 0
    %749 = vmatprep.subr.bf16.mxu0 0
    %750 = vmatpush1.bf16.xpose.msra.mxu0 0
    %751 = vmatprep.subr.bf16.mxu0 0
    %752 = vmatpush1.bf16.xpose.msra.mxu0 0
    %753 = vmatprep.subr.bf16.mxu0 0
    %754 = vmatpush1.bf16.xpose.msra.mxu0 0
    %755 = vmatprep.subr.bf16.mxu0 0
    %756 = vmatpush1.bf16.xpose.msra.mxu0 0
    %757 = vmatprep.subr.bf16.mxu0 0
    %758 = vmatpush1.bf16.xpose.msra.mxu0 0
    %759 = vmatprep.subr.bf16.mxu0 0
    %760 = vmatpush1.bf16.xpose.msra.mxu0 0
    %761 = vmatprep.subr.bf16.mxu0 0
    %762 = vmatpush1.bf16.xpose.msra.mxu0 %v747
    %763 = vmatprep.subr.bf16.mxu0 0
    %764 = vmatpush1.bf16.xpose.msra.mxu0 %v744
    %765 = vmatprep.subr.bf16.mxu0 0
    %766 = vmatpush2.bf16.xpose.msra.mxu0 0
    %767 = vmatprep.subr.bf16.mxu0 0
    %768 = vmatpush2.bf16.xpose.msra.mxu0 0
    %769 = vmatprep.subr.bf16.mxu0 0
    %770 = vmatpush2.bf16.xpose.msra.mxu0 0
    %771 = vmatprep.subr.bf16.mxu0 0
    %772 = vmatpush2.bf16.xpose.msra.mxu0 0
    %773 = vmatprep.subr.bf16.mxu0 0
    %774 = vmatpush2.bf16.xpose.msra.mxu0 0
    %775 = vmatprep.subr.bf16.mxu0 0
    %776 = vmatpush2.bf16.xpose.msra.mxu0 0
    %777 = vmatprep.subr.bf16.mxu0 0
    %778 = vmatpush2.bf16.xpose.msra.mxu0 0
    %779 = vmatprep.subr.bf16.mxu0 0
    %780 = vmatpush2.bf16.xpose.msra.mxu0 0
    %781 = vmatprep.mubr.bf16.mxu0 0
    %782 = vmatmul.mubr.bf16.gmra.mxu0 %v738
    %v783 = vpop.f32.mrf.mxu0
    %v784 = vadd.f32 %v293, %v783
    %v785 = vpop.f32.mrf.mxu0
    %v786 = vpop.f32.mrf.mxu0
    %v787 = vadd.f32 %v294, %v786
    %v788 = vpop.f32.mrf.mxu0
    %789 = vmatprep.mubr.bf16.mxu0 0
    %790 = vmatmul.mubr.bf16.gmra.mxu0 %v741
    %v791 = vpop.f32.mrf.mxu0
    %v792 = vadd.f32 %v295, %v791
    %v793 = vpop.f32.mrf.mxu0
    %v794 = vpop.f32.mrf.mxu0
    %v795 = vadd.f32 %v296, %v794
    %v796 = vpop.f32.mrf.mxu0
    %797 = vdwg.mxu0
    %v798 = vsel %vm320, %v784, -inf
    %799 = vmax.xlane.f32.xlu0 %v798
    %v800 = vpop.xlane.xlu0 %799
    %v801 = vsel %vm320, %v787, -inf
    %802 = vmax.xlane.f32.xlu0 %v801
    %v803 = vpop.xlane.xlu0 %802
    %v804 = vsel %vm320, %v792, -inf
    %805 = vmax.xlane.f32.xlu0 %v804
    %v806 = vpop.xlane.xlu0 %805
    %v807 = vsel %vm320, %v795, -inf
    %808 = vmax.xlane.f32.xlu0 %v807
    %v809 = vpop.xlane.xlu0 %808
    %v810 = vsub.f32 %v784, %v800
    %v811 = vsub.f32 %v787, %v803
    %v812 = vsub.f32 %v792, %v806
    %v813 = vsub.f32 %v795, %v809
    %v814 = vmul.f32 %v810, 1.442695
    %v815 = vpow.pop %v814
    %v816 = vmul.f32 %v811, 1.442695
    %v817 = vpow.pop %v816
    %v818 = vmul.f32 %v812, 1.442695
    %v819 = vpow.pop %v818
    %v820 = vmul.f32 %v813, 1.442695
    %v821 = vpow.pop %v820
    %v822 = vsel %vm320, %v815, 0.0
    %823 = vadd.xlane.f32.xlu0 %v822
    %v824 = vpop.xlane.xlu0 %823
    %v825 = vsel %vm320, %v817, 0.0
    %826 = vadd.xlane.f32.xlu0 %v825
    %v827 = vpop.xlane.xlu0 %826
    %v828 = vsel %vm320, %v819, 0.0
    %829 = vadd.xlane.f32.xlu0 %v828
    %v830 = vpop.xlane.xlu0 %829
    %v831 = vsel %vm320, %v821, 0.0
    %832 = vadd.xlane.f32.xlu0 %v831
    %v833 = vpop.xlane.xlu0 %832
    %v834 = vrcp.pop %v824
    %v835 = vrcp.pop %v827
    %v836 = vrcp.pop %v830
    %v837 = vrcp.pop %v833
    %v838 = vmul.f32 %v815, %v834
    %v839 = vmul.f32 %v817, %v835
    %v840 = vmul.f32 %v819, %v836
    %v841 = vmul.f32 %v821, %v837
    %v842 = vpack.c.bf16 %v839, %v838
    %v843 = vpack.c.bf16 %v841, %v840
    %844 = vrot.lane.b32.xlu0 %v376, 48
    %v845 = vpop.permute.xlu0 %844
    %846 = vrot.lane.b32.xlu0 %v377, 48
    %v847 = vpop.permute.xlu0 %846
    %v851 = vsel %vm320, %v842, 0
    %v854 = vsel %vm320, %v843, 0
    %856 = vmatprep.subr.bf16.mxu0 0
    %857 = vmatpush1.bf16.msra.mxu0 0
    %858 = vmatprep.subr.bf16.mxu0 0
    %859 = vmatpush1.bf16.msra.mxu0 0
    %860 = vmatprep.subr.bf16.mxu0 0
    %861 = vmatpush1.bf16.msra.mxu0 0
    %862 = vmatprep.subr.bf16.mxu0 0
    %863 = vmatpush1.bf16.msra.mxu0 0
    %864 = vmatprep.subr.bf16.mxu0 0
    %865 = vmatpush1.bf16.msra.mxu0 0
    %866 = vmatprep.subr.bf16.mxu0 0
    %867 = vmatpush1.bf16.msra.mxu0 0
    %868 = vmatprep.subr.bf16.mxu0 0
    %869 = vmatpush1.bf16.msra.mxu0 %v847
    %870 = vmatprep.subr.bf16.mxu0 0
    %871 = vmatpush1.bf16.msra.mxu0 %v845
    %872 = vmatprep.subr.bf16.mxu0 0
    %873 = vmatpush2.bf16.msra.mxu0 0
    %874 = vmatprep.subr.bf16.mxu0 0
    %875 = vmatpush2.bf16.msra.mxu0 0
    %876 = vmatprep.subr.bf16.mxu0 0
    %877 = vmatpush2.bf16.msra.mxu0 0
    %878 = vmatprep.subr.bf16.mxu0 0
    %879 = vmatpush2.bf16.msra.mxu0 0
    %880 = vmatprep.subr.bf16.mxu0 0
    %881 = vmatpush2.bf16.msra.mxu0 0
    %882 = vmatprep.subr.bf16.mxu0 0
    %883 = vmatpush2.bf16.msra.mxu0 0
    %884 = vmatprep.subr.bf16.mxu0 0
    %885 = vmatpush2.bf16.msra.mxu0 0
    %886 = vmatprep.subr.bf16.mxu0 0
    %887 = vmatpush2.bf16.msra.mxu0 0
    %888 = vmatprep.mubr.bf16.mxu0 0
    %889 = vmatmul.mubr.bf16.gmra.mxu0 %v851
    %v890 = vpop.f32.mrf.mxu0
    %v891 = vadd.f32 0.0, %v890
    %v892 = vpop.f32.mrf.mxu0
    %v893 = vpop.f32.mrf.mxu0
    %v894 = vadd.f32 0.0, %v893
    %v895 = vpop.f32.mrf.mxu0
    %896 = vmatprep.mubr.bf16.mxu0 0
    %897 = vmatmul.mubr.bf16.gmra.mxu0 %v854
    %v898 = vpop.f32.mrf.mxu0
    %v899 = vadd.f32 0.0, %v898
    %v900 = vpop.f32.mrf.mxu0
    %v901 = vpop.f32.mrf.mxu0
    %v902 = vadd.f32 0.0, %v901
    %v903 = vpop.f32.mrf.mxu0
    %904 = vdwg.mxu0
    %905 = vrot.lane.b32.xlu0 %v376, 104
    %v906 = vpop.permute.xlu0 %905
    %907 = vrot.lane.b32.xlu0 %v377, 104
    %v908 = vpop.permute.xlu0 %907
    %909 = vrot.lane.b32.xlu0 %v376, 72
    %v910 = vpop.permute.xlu0 %909
    %911 = vrot.lane.b32.xlu0 %v377, 72
    %v912 = vpop.permute.xlu0 %911
    %v914 = vsel %vm384, %v906, 0
    %v917 = vsel %vm384, %v908, 0
    %v920 = vsel %vm384, %v910, 0
    %v923 = vsel %vm384, %v912, 0
    %925 = vmatprep.subr.bf16.mxu0 0
    %926 = vmatpush1.bf16.xpose.msra.mxu0 0
    %927 = vmatprep.subr.bf16.mxu0 0
    %928 = vmatpush1.bf16.xpose.msra.mxu0 0
    %929 = vmatprep.subr.bf16.mxu0 0
    %930 = vmatpush1.bf16.xpose.msra.mxu0 0
    %931 = vmatprep.subr.bf16.mxu0 0
    %932 = vmatpush1.bf16.xpose.msra.mxu0 0
    %933 = vmatprep.subr.bf16.mxu0 0
    %934 = vmatpush1.bf16.xpose.msra.mxu0 0
    %935 = vmatprep.subr.bf16.mxu0 0
    %936 = vmatpush1.bf16.xpose.msra.mxu0 0
    %937 = vmatprep.subr.bf16.mxu0 0
    %938 = vmatpush1.bf16.xpose.msra.mxu0 %v923
    %939 = vmatprep.subr.bf16.mxu0 0
    %940 = vmatpush1.bf16.xpose.msra.mxu0 %v920
    %941 = vmatprep.subr.bf16.mxu0 0
    %942 = vmatpush2.bf16.xpose.msra.mxu0 0
    %943 = vmatprep.subr.bf16.mxu0 0
    %944 = vmatpush2.bf16.xpose.msra.mxu0 0
    %945 = vmatprep.subr.bf16.mxu0 0
    %946 = vmatpush2.bf16.xpose.msra.mxu0 0
    %947 = vmatprep.subr.bf16.mxu0 0
    %948 = vmatpush2.bf16.xpose.msra.mxu0 0
    %949 = vmatprep.subr.bf16.mxu0 0
    %950 = vmatpush2.bf16.xpose.msra.mxu0 0
    %951 = vmatprep.subr.bf16.mxu0 0
    %952 = vmatpush2.bf16.xpose.msra.mxu0 0
    %953 = vmatprep.subr.bf16.mxu0 0
    %954 = vmatpush2.bf16.xpose.msra.mxu0 0
    %955 = vmatprep.subr.bf16.mxu0 0
    %956 = vmatpush2.bf16.xpose.msra.mxu0 0
    %957 = vmatprep.mubr.bf16.mxu0 0
    %958 = vmatmul.mubr.bf16.gmra.mxu0 %v914
    %v959 = vpop.f32.mrf.mxu0
    %v960 = vadd.f32 %v293, %v959
    %v961 = vpop.f32.mrf.mxu0
    %v962 = vpop.f32.mrf.mxu0
    %v963 = vadd.f32 %v294, %v962
    %v964 = vpop.f32.mrf.mxu0
    %965 = vmatprep.mubr.bf16.mxu0 0
    %966 = vmatmul.mubr.bf16.gmra.mxu0 %v917
    %v967 = vpop.f32.mrf.mxu0
    %v968 = vadd.f32 %v295, %v967
    %v969 = vpop.f32.mrf.mxu0
    %v970 = vpop.f32.mrf.mxu0
    %v971 = vadd.f32 %v296, %v970
    %v972 = vpop.f32.mrf.mxu0
    %973 = vdwg.mxu0
    %v974 = vsel %vm320, %v960, -inf
    %975 = vmax.xlane.f32.xlu0 %v974
    %v976 = vpop.xlane.xlu0 %975
    %v977 = vsel %vm320, %v963, -inf
    %978 = vmax.xlane.f32.xlu0 %v977
    %v979 = vpop.xlane.xlu0 %978
    %v980 = vsel %vm320, %v968, -inf
    %981 = vmax.xlane.f32.xlu0 %v980
    %v982 = vpop.xlane.xlu0 %981
    %v983 = vsel %vm320, %v971, -inf
    %984 = vmax.xlane.f32.xlu0 %v983
    %v985 = vpop.xlane.xlu0 %984
    %v986 = vsub.f32 %v960, %v976
    %v987 = vsub.f32 %v963, %v979
    %v988 = vsub.f32 %v968, %v982
    %v989 = vsub.f32 %v971, %v985
    %v990 = vmul.f32 %v986, 1.442695
    %v991 = vpow.pop %v990
    %v992 = vmul.f32 %v987, 1.442695
    %v993 = vpow.pop %v992
    %v994 = vmul.f32 %v988, 1.442695
    %v995 = vpow.pop %v994
    %v996 = vmul.f32 %v989, 1.442695
    %v997 = vpow.pop %v996
    %v998 = vsel %vm320, %v991, 0.0
    %999 = vadd.xlane.f32.xlu0 %v998
    %v1000 = vpop.xlane.xlu0 %999
    %v1001 = vsel %vm320, %v993, 0.0
    %1002 = vadd.xlane.f32.xlu0 %v1001
    %v1003 = vpop.xlane.xlu0 %1002
    %v1004 = vsel %vm320, %v995, 0.0
    %1005 = vadd.xlane.f32.xlu0 %v1004
    %v1006 = vpop.xlane.xlu0 %1005
    %v1007 = vsel %vm320, %v997, 0.0
    %1008 = vadd.xlane.f32.xlu0 %v1007
    %v1009 = vpop.xlane.xlu0 %1008
    %v1010 = vrcp.pop %v1000
    %v1011 = vrcp.pop %v1003
    %v1012 = vrcp.pop %v1006
    %v1013 = vrcp.pop %v1009
    %v1014 = vmul.f32 %v991, %v1010
    %v1015 = vmul.f32 %v993, %v1011
    %v1016 = vmul.f32 %v995, %v1012
    %v1017 = vmul.f32 %v997, %v1013
    %v1018 = vpack.c.bf16 %v1015, %v1014
    %v1019 = vpack.c.bf16 %v1017, %v1016
    %1020 = vrot.lane.b32.xlu0 %v376, 40
    %v1021 = vpop.permute.xlu0 %1020
    %1022 = vrot.lane.b32.xlu0 %v377, 40
    %v1023 = vpop.permute.xlu0 %1022
    %v1027 = vsel %vm320, %v1018, 0
    %v1030 = vsel %vm320, %v1019, 0
    %1032 = vmatprep.subr.bf16.mxu0 0
    %1033 = vmatpush1.bf16.msra.mxu0 0
    %1034 = vmatprep.subr.bf16.mxu0 0
    %1035 = vmatpush1.bf16.msra.mxu0 0
    %1036 = vmatprep.subr.bf16.mxu0 0
    %1037 = vmatpush1.bf16.msra.mxu0 0
    %1038 = vmatprep.subr.bf16.mxu0 0
    %1039 = vmatpush1.bf16.msra.mxu0 0
    %1040 = vmatprep.subr.bf16.mxu0 0
    %1041 = vmatpush1.bf16.msra.mxu0 0
    %1042 = vmatprep.subr.bf16.mxu0 0
    %1043 = vmatpush1.bf16.msra.mxu0 0
    %1044 = vmatprep.subr.bf16.mxu0 0
    %1045 = vmatpush1.bf16.msra.mxu0 %v1023
    %1046 = vmatprep.subr.bf16.mxu0 0
    %1047 = vmatpush1.bf16.msra.mxu0 %v1021
    %1048 = vmatprep.subr.bf16.mxu0 0
    %1049 = vmatpush2.bf16.msra.mxu0 0
    %1050 = vmatprep.subr.bf16.mxu0 0
    %1051 = vmatpush2.bf16.msra.mxu0 0
    %1052 = vmatprep.subr.bf16.mxu0 0
    %1053 = vmatpush2.bf16.msra.mxu0 0
    %1054 = vmatprep.subr.bf16.mxu0 0
    %1055 = vmatpush2.bf16.msra.mxu0 0
    %1056 = vmatprep.subr.bf16.mxu0 0
    %1057 = vmatpush2.bf16.msra.mxu0 0
    %1058 = vmatprep.subr.bf16.mxu0 0
    %1059 = vmatpush2.bf16.msra.mxu0 0
    %1060 = vmatprep.subr.bf16.mxu0 0
    %1061 = vmatpush2.bf16.msra.mxu0 0
    %1062 = vmatprep.subr.bf16.mxu0 0
    %1063 = vmatpush2.bf16.msra.mxu0 0
    %1064 = vmatprep.mubr.bf16.mxu0 0
    %1065 = vmatmul.mubr.bf16.gmra.mxu0 %v1027
    %v1066 = vpop.f32.mrf.mxu0
    %v1067 = vadd.f32 0.0, %v1066
    %v1068 = vpop.f32.mrf.mxu0
    %v1069 = vpop.f32.mrf.mxu0
    %v1070 = vadd.f32 0.0, %v1069
    %v1071 = vpop.f32.mrf.mxu0
    %1072 = vmatprep.mubr.bf16.mxu0 0
    %1073 = vmatmul.mubr.bf16.gmra.mxu0 %v1030
    %v1074 = vpop.f32.mrf.mxu0
    %v1075 = vadd.f32 0.0, %v1074
    %v1076 = vpop.f32.mrf.mxu0
    %v1077 = vpop.f32.mrf.mxu0
    %v1078 = vadd.f32 0.0, %v1077
    %v1079 = vpop.f32.mrf.mxu0
    %1080 = vdwg.mxu0
    %1085 = vrot.lane.b32.xlu0 %v715, 8
    %v1086 = vpop.permute.xlu0 %1085
    %1087 = vrot.lane.b32.xlu0 %v718, 8
    %v1088 = vpop.permute.xlu0 %1087
    %1089 = vrot.lane.b32.xlu0 %v723, 8
    %v1090 = vpop.permute.xlu0 %1089
    %1091 = vrot.lane.b32.xlu0 %v726, 8
    %v1092 = vpop.permute.xlu0 %1091
    %1101 = vrot.lane.b32.xlu0 %v891, 16
    %v1102 = vpop.permute.xlu0 %1101
    %1103 = vrot.lane.b32.xlu0 %v894, 16
    %v1104 = vpop.permute.xlu0 %1103
    %1105 = vrot.lane.b32.xlu0 %v899, 16
    %v1106 = vpop.permute.xlu0 %1105
    %1107 = vrot.lane.b32.xlu0 %v902, 16
    %v1108 = vpop.permute.xlu0 %1107
    %1117 = vrot.lane.b32.xlu0 %v1067, 24
    %v1118 = vpop.permute.xlu0 %1117
    %1119 = vrot.lane.b32.xlu0 %v1070, 24
    %v1120 = vpop.permute.xlu0 %1119
    %1121 = vrot.lane.b32.xlu0 %v1075, 24
    %v1122 = vpop.permute.xlu0 %1121
    %1123 = vrot.lane.b32.xlu0 %v1078, 24
    %v1124 = vpop.permute.xlu0 %1123
    %v1129 = vsel %vm384, %v539, %v1086
    %v1130 = vsel %vm384, %v542, %v1088
    %v1131 = vsel %vm384, %v547, %v1090
    %v1132 = vsel %vm384, %v550, %v1092
    %vm1133 = vcmask 130048
    %v1134 = vsel %vm1133, %v1129, %v1102
    %v1135 = vsel %vm1133, %v1130, %v1104
    %v1136 = vsel %vm1133, %v1131, %v1106
    %v1137 = vsel %vm1133, %v1132, %v1108
    %vm1138 = vcmask 195584
    %v1139 = vsel %vm1138, %v1134, %v1118
    %v1140 = vsel %vm1138, %v1135, %v1120
    %v1141 = vsel %vm1138, %v1136, %v1122
    %v1142 = vsel %vm1138, %v1137, %v1124
    %v1143 = vld [vmem:[%s4] sm:$0xf]
    %v1144 = vld [vmem:[%s4 + $0x4] sm:$0xf]
    %v1145 = vld [vmem:[%s4 + $0x8] sm:$0xf]
    %v1146 = vld [vmem:[%s4 + $0xc] sm:$0xf]
    %v1147 = vpack.c.bf16 %v1140, %v1139
    %v1148 = vpack.c.bf16 %v1142, %v1141
    %v1149 = vld [vmem:[#allocation5] sm:$0x1]
    %v1151 = vlaneseq
    %v1152 = vshrl.u32 %v1151, 7
    %v1153 = vsub.s32 0, %v1152
    %v1154 = vrot.slane %v1149, %v1153
    %v1160 = vunpack.c.l.b16 %v1143
    %v1161 = vunpack.c.l.b16 %v1144
    %v1162 = vunpack.c.l.b16 %v1145
    %v1163 = vunpack.c.l.b16 %v1146
    %v1164 = vpack.c.b16 %v1161, %v1160
    %v1165 = vpack.c.b16 %v1163, %v1162
    %v1169 = vsel %vm320, %v1147, 0
    %v1172 = vsel %vm320, %v1148, 0
    %1174 = vmatprep.subr.bf16.mxu0 0
    %1175 = vmatpush1.bf16.msra.mxu0 0
    %1176 = vmatprep.subr.bf16.mxu0 0
    %1177 = vmatpush1.bf16.msra.mxu0 0
    %1178 = vmatprep.subr.bf16.mxu0 0
    %1179 = vmatpush1.bf16.msra.mxu0 0
    %1180 = vmatprep.subr.bf16.mxu0 0
    %1181 = vmatpush1.bf16.msra.mxu0 0
    %1182 = vmatprep.subr.bf16.mxu0 0
    %1183 = vmatpush1.bf16.msra.mxu0 0
    %1184 = vmatprep.subr.bf16.mxu0 0
    %1185 = vmatpush1.bf16.msra.mxu0 0
    %1186 = vmatprep.subr.bf16.mxu0 0
    %1187 = vmatpush1.bf16.msra.mxu0 %v1165
    %1188 = vmatprep.subr.bf16.mxu0 0
    %1189 = vmatpush1.bf16.msra.mxu0 %v1164
    %1190 = vmatprep.subr.bf16.mxu0 0
    %1191 = vmatpush2.bf16.msra.mxu0 0
    %1192 = vmatprep.subr.bf16.mxu0 0
    %1193 = vmatpush2.bf16.msra.mxu0 0
    %1194 = vmatprep.subr.bf16.mxu0 0
    %1195 = vmatpush2.bf16.msra.mxu0 0
    %1196 = vmatprep.subr.bf16.mxu0 0
    %1197 = vmatpush2.bf16.msra.mxu0 0
    %1198 = vmatprep.subr.bf16.mxu0 0
    %1199 = vmatpush2.bf16.msra.mxu0 0
    %1200 = vmatprep.subr.bf16.mxu0 0
    %1201 = vmatpush2.bf16.msra.mxu0 0
    %1202 = vmatprep.subr.bf16.mxu0 0
    %1203 = vmatpush2.bf16.msra.mxu0 0
    %1204 = vmatprep.subr.bf16.mxu0 0
    %1205 = vmatpush2.bf16.msra.mxu0 0
    %1206 = vmatprep.mubr.bf16.mxu0 0
    %1207 = vmatmul.mubr.bf16.gmra.mxu0 %v1169
    %v1208 = vpop.f32.mrf.mxu0
    %v1209 = vadd.f32 %v1154, %v1208
    %v1210 = vpop.f32.mrf.mxu0
    %v1211 = vpop.f32.mrf.mxu0
    %v1212 = vadd.f32 %v1154, %v1211
    %v1213 = vpop.f32.mrf.mxu0
    %1214 = vmatprep.mubr.bf16.mxu0 0
    %1215 = vmatmul.mubr.bf16.gmra.mxu0 %v1172
    %v1216 = vpop.f32.mrf.mxu0
    %v1217 = vadd.f32 %v1154, %v1216
    %v1218 = vpop.f32.mrf.mxu0
    %v1219 = vpop.f32.mrf.mxu0
    %v1220 = vadd.f32 %v1154, %v1219
    %v1221 = vpop.f32.mrf.mxu0
    %1222 = vdwg.mxu0
    %v1227 = vcombine.high %v1209, %v1209
    %v1229 = vunpack.c.l.s4 1983009808
    %v1230 = vunpack.c.0.s8 %v1229
    %v1231 = vlaneseq
    %v1232 = vshrl.u32 %v1231, 7
    %v1233 = vsub.s32 %v1230, %v1232
    %v1234 = vrot.slane %v1209, %v1233
    %v1236 = vunpack.c.l.s4 1983009808
    %v1237 = vunpack.c.0.s8 %v1236
    %v1238 = vlaneseq
    %v1239 = vshrl.u32 %v1238, 7
    %v1240 = vsub.s32 %v1237, %v1239
    %v1241 = vrot.slane %v1227, %v1240
    %v1242 = vcombine.high %v1234, %v1234
    %v1243 = vcombine.high %v1241, %v1241
    %v1244 = vcombine.high %v1212, %v1212
    %v1246 = vunpack.c.l.s4 1983009808
    %v1247 = vunpack.c.0.s8 %v1246
    %v1248 = vlaneseq
    %v1249 = vshrl.u32 %v1248, 7
    %v1250 = vsub.s32 %v1247, %v1249
    %v1251 = vrot.slane %v1212, %v1250
    %v1253 = vunpack.c.l.s4 1983009808
    %v1254 = vunpack.c.0.s8 %v1253
    %v1255 = vlaneseq
    %v1256 = vshrl.u32 %v1255, 7
    %v1257 = vsub.s32 %v1254, %v1256
    %v1258 = vrot.slane %v1244, %v1257
    %v1259 = vcombine.high %v1251, %v1251
    %v1260 = vcombine.high %v1258, %v1258
    %v1261 = vcombine.high %v1217, %v1217
    %v1263 = vunpack.c.l.s4 1983009808
    %v1264 = vunpack.c.0.s8 %v1263
    %v1265 = vlaneseq
    %v1266 = vshrl.u32 %v1265, 7
    %v1267 = vsub.s32 %v1264, %v1266
    %v1268 = vrot.slane %v1217, %v1267
    %v1270 = vunpack.c.l.s4 1983009808
    %v1271 = vunpack.c.0.s8 %v1270
    %v1272 = vlaneseq
    %v1273 = vshrl.u32 %v1272, 7
    %v1274 = vsub.s32 %v1271, %v1273
    %v1275 = vrot.slane %v1261, %v1274
    %v1276 = vcombine.high %v1268, %v1268
    %v1277 = vcombine.high %v1275, %v1275
    %v1278 = vcombine.high %v1220, %v1220
    %v1280 = vunpack.c.l.s4 1983009808
    %v1281 = vunpack.c.0.s8 %v1280
    %v1282 = vlaneseq
    %v1283 = vshrl.u32 %v1282, 7
    %v1284 = vsub.s32 %v1281, %v1283
    %v1285 = vrot.slane %v1220, %v1284
    %v1287 = vunpack.c.l.s4 1983009808
    %v1288 = vunpack.c.0.s8 %v1287
    %v1289 = vlaneseq
    %v1290 = vshrl.u32 %v1289, 7
    %v1291 = vsub.s32 %v1288, %v1290
    %v1292 = vrot.slane %v1278, %v1291
    %v1293 = vcombine.high %v1285, %v1285
    %v1294 = vcombine.high %v1292, %v1292
    %v1311 = vadd.f32 %v116, %v1234
    %v1312 = vadd.f32 %v117, %v1242
    %v1313 = vadd.f32 %v118, %v1241
    %v1314 = vadd.f32 %v119, %v1243
    %v1315 = vadd.f32 %v120, %v1251
    %v1316 = vadd.f32 %v121, %v1259
    %v1317 = vadd.f32 %v122, %v1258
    %v1318 = vadd.f32 %v123, %v1260
    %v1319 = vadd.f32 %v124, %v1268
    %v1320 = vadd.f32 %v125, %v1276
    %v1321 = vadd.f32 %v126, %v1275
    %v1322 = vadd.f32 %v127, %v1277
    %v1323 = vadd.f32 %v128, %v1285
    %v1324 = vadd.f32 %v129, %v1293
    %v1325 = vadd.f32 %v130, %v1292
    %v1326 = vadd.f32 %v131, %v1294
    %v1343 = vcombine.low %v1311, %v1312
    %v1344 = vcombine.low %v1313, %v1314
    %v1346 = vunpack.c.l.s4 1983009808
    %v1347 = vunpack.c.0.s8 %v1346
    %v1348 = vlaneseq
    %v1349 = vshrl.u32 %v1348, 7
    %v1350 = vsub.s32 %v1347, %v1349
    %v1351 = vrot.slane %v1343, %v1350
    %v1353 = vunpack.c.l.s4 1983009808
    %v1354 = vunpack.c.0.s8 %v1353
    %v1355 = vlaneseq
    %v1356 = vshrl.u32 %v1355, 7
    %v1357 = vsub.s32 %v1354, %v1356
    %v1358 = vrot.slane %v1344, %v1357
    %v1359 = vcombine.low %v1351, %v1358
    %v1360 = vcombine.low %v1315, %v1316
    %v1361 = vcombine.low %v1317, %v1318
    %v1363 = vunpack.c.l.s4 1983009808
    %v1364 = vunpack.c.0.s8 %v1363
    %v1365 = vlaneseq
    %v1366 = vshrl.u32 %v1365, 7
    %v1367 = vsub.s32 %v1364, %v1366
    %v1368 = vrot.slane %v1360, %v1367
    %v1370 = vunpack.c.l.s4 1983009808
    %v1371 = vunpack.c.0.s8 %v1370
    %v1372 = vlaneseq
    %v1373 = vshrl.u32 %v1372, 7
    %v1374 = vsub.s32 %v1371, %v1373
    %v1375 = vrot.slane %v1361, %v1374
    %v1376 = vcombine.low %v1368, %v1375
    %v1377 = vcombine.low %v1319, %v1320
    %v1378 = vcombine.low %v1321, %v1322
    %v1380 = vunpack.c.l.s4 1983009808
    %v1381 = vunpack.c.0.s8 %v1380
    %v1382 = vlaneseq
    %v1383 = vshrl.u32 %v1382, 7
    %v1384 = vsub.s32 %v1381, %v1383
    %v1385 = vrot.slane %v1377, %v1384
    %v1387 = vunpack.c.l.s4 1983009808
    %v1388 = vunpack.c.0.s8 %v1387
    %v1389 = vlaneseq
    %v1390 = vshrl.u32 %v1389, 7
    %v1391 = vsub.s32 %v1388, %v1390
    %v1392 = vrot.slane %v1378, %v1391
    %v1393 = vcombine.low %v1385, %v1392
    %v1394 = vcombine.low %v1323, %v1324
    %v1395 = vcombine.low %v1325, %v1326
    %v1397 = vunpack.c.l.s4 1983009808
    %v1398 = vunpack.c.0.s8 %v1397
    %v1399 = vlaneseq
    %v1400 = vshrl.u32 %v1399, 7
    %v1401 = vsub.s32 %v1398, %v1400
    %v1402 = vrot.slane %v1394, %v1401
    %v1404 = vunpack.c.l.s4 1983009808
    %v1405 = vunpack.c.0.s8 %v1404
    %v1406 = vlaneseq
    %v1407 = vshrl.u32 %v1406, 7
    %v1408 = vsub.s32 %v1405, %v1407
    %v1409 = vrot.slane %v1395, %v1408
    %v1410 = vcombine.low %v1402, %v1409
    %v1415 = vsel %vm320, %v1359, 0.0
    %1416 = vadd.xlane.f32.xlu0 %v1415
    %v1417 = vpop.xlane.xlu0 %1416
    %v1418 = vsel %vm320, %v1376, 0.0
    %1419 = vadd.xlane.f32.xlu0 %v1418
    %v1420 = vpop.xlane.xlu0 %1419
    %v1421 = vsel %vm320, %v1393, 0.0
    %1422 = vadd.xlane.f32.xlu0 %v1421
    %v1423 = vpop.xlane.xlu0 %1422
    %v1424 = vsel %vm320, %v1410, 0.0
    %1425 = vadd.xlane.f32.xlu0 %v1424
    %v1426 = vpop.xlane.xlu0 %1425
    %v1427 = vrcp.pop 32.0
    %v1428 = vmul.f32 %v1417, %v1427
    %v1429 = vmul.f32 %v1420, %v1427
    %v1430 = vmul.f32 %v1423, %v1427
    %v1431 = vmul.f32 %v1426, %v1427
    %v1432 = vmul.f32 %v1311, %v1311
    %v1433 = vmul.f32 %v1312, %v1312
    %v1434 = vmul.f32 %v1313, %v1313
    %v1435 = vmul.f32 %v1314, %v1314
    %v1436 = vmul.f32 %v1315, %v1315
    %v1437 = vmul.f32 %v1316, %v1316
    %v1438 = vmul.f32 %v1317, %v1317
    %v1439 = vmul.f32 %v1318, %v1318
    %v1440 = vmul.f32 %v1319, %v1319
    %v1441 = vmul.f32 %v1320, %v1320
    %v1442 = vmul.f32 %v1321, %v1321
    %v1443 = vmul.f32 %v1322, %v1322
    %v1444 = vmul.f32 %v1323, %v1323
    %v1445 = vmul.f32 %v1324, %v1324
    %v1446 = vmul.f32 %v1325, %v1325
    %v1447 = vmul.f32 %v1326, %v1326
    %v1464 = vcombine.low %v1432, %v1433
    %v1465 = vcombine.low %v1434, %v1435
    %v1467 = vunpack.c.l.s4 1983009808
    %v1468 = vunpack.c.0.s8 %v1467
    %v1469 = vlaneseq
    %v1470 = vshrl.u32 %v1469, 7
    %v1471 = vsub.s32 %v1468, %v1470
    %v1472 = vrot.slane %v1464, %v1471
    %v1474 = vunpack.c.l.s4 1983009808
    %v1475 = vunpack.c.0.s8 %v1474
    %v1476 = vlaneseq
    %v1477 = vshrl.u32 %v1476, 7
    %v1478 = vsub.s32 %v1475, %v1477
    %v1479 = vrot.slane %v1465, %v1478
    %v1480 = vcombine.low %v1472, %v1479
    %v1481 = vcombine.low %v1436, %v1437
    %v1482 = vcombine.low %v1438, %v1439
    %v1484 = vunpack.c.l.s4 1983009808
    %v1485 = vunpack.c.0.s8 %v1484
    %v1486 = vlaneseq
    %v1487 = vshrl.u32 %v1486, 7
    %v1488 = vsub.s32 %v1485, %v1487
    %v1489 = vrot.slane %v1481, %v1488
    %v1491 = vunpack.c.l.s4 1983009808
    %v1492 = vunpack.c.0.s8 %v1491
    %v1493 = vlaneseq
    %v1494 = vshrl.u32 %v1493, 7
    %v1495 = vsub.s32 %v1492, %v1494
    %v1496 = vrot.slane %v1482, %v1495
    %v1497 = vcombine.low %v1489, %v1496
    %v1498 = vcombine.low %v1440, %v1441
    %v1499 = vcombine.low %v1442, %v1443
    %v1501 = vunpack.c.l.s4 1983009808
    %v1502 = vunpack.c.0.s8 %v1501
    %v1503 = vlaneseq
    %v1504 = vshrl.u32 %v1503, 7
    %v1505 = vsub.s32 %v1502, %v1504
    %v1506 = vrot.slane %v1498, %v1505
    %v1508 = vunpack.c.l.s4 1983009808
    %v1509 = vunpack.c.0.s8 %v1508
    %v1510 = vlaneseq
    %v1511 = vshrl.u32 %v1510, 7
    %v1512 = vsub.s32 %v1509, %v1511
    %v1513 = vrot.slane %v1499, %v1512
    %v1514 = vcombine.low %v1506, %v1513
    %v1515 = vcombine.low %v1444, %v1445
    %v1516 = vcombine.low %v1446, %v1447
    %v1518 = vunpack.c.l.s4 1983009808
    %v1519 = vunpack.c.0.s8 %v1518
    %v1520 = vlaneseq
    %v1521 = vshrl.u32 %v1520, 7
    %v1522 = vsub.s32 %v1519, %v1521
    %v1523 = vrot.slane %v1515, %v1522
    %v1525 = vunpack.c.l.s4 1983009808
    %v1526 = vunpack.c.0.s8 %v1525
    %v1527 = vlaneseq
    %v1528 = vshrl.u32 %v1527, 7
    %v1529 = vsub.s32 %v1526, %v1528
    %v1530 = vrot.slane %v1516, %v1529
    %v1531 = vcombine.low %v1523, %v1530
    %v1536 = vsel %vm320, %v1480, 0.0
    %1537 = vadd.xlane.f32.xlu0 %v1536
    %v1538 = vpop.xlane.xlu0 %1537
    %v1539 = vsel %vm320, %v1497, 0.0
    %1540 = vadd.xlane.f32.xlu0 %v1539
    %v1541 = vpop.xlane.xlu0 %1540
    %v1542 = vsel %vm320, %v1514, 0.0
    %1543 = vadd.xlane.f32.xlu0 %v1542
    %v1544 = vpop.xlane.xlu0 %1543
    %v1545 = vsel %vm320, %v1531, 0.0
    %1546 = vadd.xlane.f32.xlu0 %v1545
    %v1547 = vpop.xlane.xlu0 %1546
    %v1548 = vmul.f32 %v1538, %v1427
    %v1549 = vmul.f32 %v1541, %v1427
    %v1550 = vmul.f32 %v1544, %v1427
    %v1551 = vmul.f32 %v1547, %v1427
    %v1552 = vmul.f32 %v1428, %v1428
    %v1553 = vmul.f32 %v1429, %v1429
    %v1554 = vmul.f32 %v1430, %v1430
    %v1555 = vmul.f32 %v1431, %v1431
    %v1556 = vsub.f32 %v1548, %v1552
    %v1557 = vsub.f32 %v1549, %v1553
    %v1558 = vsub.f32 %v1550, %v1554
    %v1559 = vsub.f32 %v1551, %v1555
    %v1565 = vunpack.c.l.s4 269488144
    %v1566 = vunpack.c.0.s8 %v1565
    %v1567 = vlaneseq
    %v1568 = vshrl.u32 %v1567, 7
    %v1569 = vsub.s32 %v1566, %v1568
    %v1570 = vrot.slane %v1428, %v1569
    %v1572 = vunpack.c.l.s4 842150450
    %v1573 = vunpack.c.0.s8 %v1572
    %v1574 = vlaneseq
    %v1575 = vshrl.u32 %v1574, 7
    %v1576 = vsub.s32 %v1573, %v1575
    %v1577 = vrot.slane %v1428, %v1576
    %v1579 = vunpack.c.l.s4 1414812756
    %v1580 = vunpack.c.0.s8 %v1579
    %v1581 = vlaneseq
    %v1582 = vshrl.u32 %v1581, 7
    %v1583 = vsub.s32 %v1580, %v1582
    %v1584 = vrot.slane %v1428, %v1583
    %v1586 = vunpack.c.l.s4 1987475062
    %v1587 = vunpack.c.0.s8 %v1586
    %v1588 = vlaneseq
    %v1589 = vshrl.u32 %v1588, 7
    %v1590 = vsub.s32 %v1587, %v1589
    %v1591 = vrot.slane %v1428, %v1590
    %v1593 = vunpack.c.l.s4 269488144
    %v1594 = vunpack.c.0.s8 %v1593
    %v1595 = vlaneseq
    %v1596 = vshrl.u32 %v1595, 7
    %v1597 = vsub.s32 %v1594, %v1596
    %v1598 = vrot.slane %v1429, %v1597
    %v1600 = vunpack.c.l.s4 842150450
    %v1601 = vunpack.c.0.s8 %v1600
    %v1602 = vlaneseq
    %v1603 = vshrl.u32 %v1602, 7
    %v1604 = vsub.s32 %v1601, %v1603
    %v1605 = vrot.slane %v1429, %v1604
    %v1607 = vunpack.c.l.s4 1414812756
    %v1608 = vunpack.c.0.s8 %v1607
    %v1609 = vlaneseq
    %v1610 = vshrl.u32 %v1609, 7
    %v1611 = vsub.s32 %v1608, %v1610
    %v1612 = vrot.slane %v1429, %v1611
    %v1614 = vunpack.c.l.s4 1987475062
    %v1615 = vunpack.c.0.s8 %v1614
    %v1616 = vlaneseq
    %v1617 = vshrl.u32 %v1616, 7
    %v1618 = vsub.s32 %v1615, %v1617
    %v1619 = vrot.slane %v1429, %v1618
    %v1621 = vunpack.c.l.s4 269488144
    %v1622 = vunpack.c.0.s8 %v1621
    %v1623 = vlaneseq
    %v1624 = vshrl.u32 %v1623, 7
    %v1625 = vsub.s32 %v1622, %v1624
    %v1626 = vrot.slane %v1430, %v1625
    %v1628 = vunpack.c.l.s4 842150450
    %v1629 = vunpack.c.0.s8 %v1628
    %v1630 = vlaneseq
    %v1631 = vshrl.u32 %v1630, 7
    %v1632 = vsub.s32 %v1629, %v1631
    %v1633 = vrot.slane %v1430, %v1632
    %v1635 = vunpack.c.l.s4 1414812756
    %v1636 = vunpack.c.0.s8 %v1635
    %v1637 = vlaneseq
    %v1638 = vshrl.u32 %v1637, 7
    %v1639 = vsub.s32 %v1636, %v1638
    %v1640 = vrot.slane %v1430, %v1639
    %v1642 = vunpack.c.l.s4 1987475062
    %v1643 = vunpack.c.0.s8 %v1642
    %v1644 = vlaneseq
    %v1645 = vshrl.u32 %v1644, 7
    %v1646 = vsub.s32 %v1643, %v1645
    %v1647 = vrot.slane %v1430, %v1646
    %v1649 = vunpack.c.l.s4 269488144
    %v1650 = vunpack.c.0.s8 %v1649
    %v1651 = vlaneseq
    %v1652 = vshrl.u32 %v1651, 7
    %v1653 = vsub.s32 %v1650, %v1652
    %v1654 = vrot.slane %v1431, %v1653
    %v1656 = vunpack.c.l.s4 842150450
    %v1657 = vunpack.c.0.s8 %v1656
    %v1658 = vlaneseq
    %v1659 = vshrl.u32 %v1658, 7
    %v1660 = vsub.s32 %v1657, %v1659
    %v1661 = vrot.slane %v1431, %v1660
    %v1663 = vunpack.c.l.s4 1414812756
    %v1664 = vunpack.c.0.s8 %v1663
    %v1665 = vlaneseq
    %v1666 = vshrl.u32 %v1665, 7
    %v1667 = vsub.s32 %v1664, %v1666
    %v1668 = vrot.slane %v1431, %v1667
    %v1670 = vunpack.c.l.s4 1987475062
    %v1671 = vunpack.c.0.s8 %v1670
    %v1672 = vlaneseq
    %v1673 = vshrl.u32 %v1672, 7
    %v1674 = vsub.s32 %v1671, %v1673
    %v1675 = vrot.slane %v1431, %v1674
    %v1692 = vsub.f32 %v1311, %v1570
    %v1693 = vsub.f32 %v1312, %v1577
    %v1694 = vsub.f32 %v1313, %v1584
    %v1695 = vsub.f32 %v1314, %v1591
    %v1696 = vsub.f32 %v1315, %v1598
    %v1697 = vsub.f32 %v1316, %v1605
    %v1698 = vsub.f32 %v1317, %v1612
    %v1699 = vsub.f32 %v1318, %v1619
    %v1700 = vsub.f32 %v1319, %v1626
    %v1701 = vsub.f32 %v1320, %v1633
    %v1702 = vsub.f32 %v1321, %v1640
    %v1703 = vsub.f32 %v1322, %v1647
    %v1704 = vsub.f32 %v1323, %v1654
    %v1705 = vsub.f32 %v1324, %v1661
    %v1706 = vsub.f32 %v1325, %v1668
    %v1707 = vsub.f32 %v1326, %v1675
    %v1708 = vadd.f32 %v1556, 1e-05
    %v1709 = vadd.f32 %v1557, 1e-05
    %v1710 = vadd.f32 %v1558, 1e-05
    %v1711 = vadd.f32 %v1559, 1e-05
    %v1712 = vrsqrt.pop %v1708
    %v1713 = vrsqrt.pop %v1709
    %v1714 = vrsqrt.pop %v1710
    %v1715 = vrsqrt.pop %v1711
    %v1721 = vunpack.c.l.s4 269488144
    %v1722 = vunpack.c.0.s8 %v1721
    %v1723 = vlaneseq
    %v1724 = vshrl.u32 %v1723, 7
    %v1725 = vsub.s32 %v1722, %v1724
    %v1726 = vrot.slane %v1712, %v1725
    %v1728 = vunpack.c.l.s4 842150450
    %v1729 = vunpack.c.0.s8 %v1728
    %v1730 = vlaneseq
    %v1731 = vshrl.u32 %v1730, 7
    %v1732 = vsub.s32 %v1729, %v1731
    %v1733 = vrot.slane %v1712, %v1732
    %v1735 = vunpack.c.l.s4 1414812756
    %v1736 = vunpack.c.0.s8 %v1735
    %v1737 = vlaneseq
    %v1738 = vshrl.u32 %v1737, 7
    %v1739 = vsub.s32 %v1736, %v1738
    %v1740 = vrot.slane %v1712, %v1739
    %v1742 = vunpack.c.l.s4 1987475062
    %v1743 = vunpack.c.0.s8 %v1742
    %v1744 = vlaneseq
    %v1745 = vshrl.u32 %v1744, 7
    %v1746 = vsub.s32 %v1743, %v1745
    %v1747 = vrot.slane %v1712, %v1746
    %v1749 = vunpack.c.l.s4 269488144
    %v1750 = vunpack.c.0.s8 %v1749
    %v1751 = vlaneseq
    %v1752 = vshrl.u32 %v1751, 7
    %v1753 = vsub.s32 %v1750, %v1752
    %v1754 = vrot.slane %v1713, %v1753
    %v1756 = vunpack.c.l.s4 842150450
    %v1757 = vunpack.c.0.s8 %v1756
    %v1758 = vlaneseq
    %v1759 = vshrl.u32 %v1758, 7
    %v1760 = vsub.s32 %v1757, %v1759
    %v1761 = vrot.slane %v1713, %v1760
    %v1763 = vunpack.c.l.s4 1414812756
    %v1764 = vunpack.c.0.s8 %v1763
    %v1765 = vlaneseq
    %v1766 = vshrl.u32 %v1765, 7
    %v1767 = vsub.s32 %v1764, %v1766
    %v1768 = vrot.slane %v1713, %v1767
    %v1770 = vunpack.c.l.s4 1987475062
    %v1771 = vunpack.c.0.s8 %v1770
    %v1772 = vlaneseq
    %v1773 = vshrl.u32 %v1772, 7
    %v1774 = vsub.s32 %v1771, %v1773
    %v1775 = vrot.slane %v1713, %v1774
    %v1777 = vunpack.c.l.s4 269488144
    %v1778 = vunpack.c.0.s8 %v1777
    %v1779 = vlaneseq
    %v1780 = vshrl.u32 %v1779, 7
    %v1781 = vsub.s32 %v1778, %v1780
    %v1782 = vrot.slane %v1714, %v1781
    %v1784 = vunpack.c.l.s4 842150450
    %v1785 = vunpack.c.0.s8 %v1784
    %v1786 = vlaneseq
    %v1787 = vshrl.u32 %v1786, 7
    %v1788 = vsub.s32 %v1785, %v1787
    %v1789 = vrot.slane %v1714, %v1788
    %v1791 = vunpack.c.l.s4 1414812756
    %v1792 = vunpack.c.0.s8 %v1791
    %v1793 = vlaneseq
    %v1794 = vshrl.u32 %v1793, 7
    %v1795 = vsub.s32 %v1792, %v1794
    %v1796 = vrot.slane %v1714, %v1795
    %v1798 = vunpack.c.l.s4 1987475062
    %v1799 = vunpack.c.0.s8 %v1798
    %v1800 = vlaneseq
    %v1801 = vshrl.u32 %v1800, 7
    %v1802 = vsub.s32 %v1799, %v1801
    %v1803 = vrot.slane %v1714, %v1802
    %v1805 = vunpack.c.l.s4 269488144
    %v1806 = vunpack.c.0.s8 %v1805
    %v1807 = vlaneseq
    %v1808 = vshrl.u32 %v1807, 7
    %v1809 = vsub.s32 %v1806, %v1808
    %v1810 = vrot.slane %v1715, %v1809
    %v1812 = vunpack.c.l.s4 842150450
    %v1813 = vunpack.c.0.s8 %v1812
    %v1814 = vlaneseq
    %v1815 = vshrl.u32 %v1814, 7
    %v1816 = vsub.s32 %v1813, %v1815
    %v1817 = vrot.slane %v1715, %v1816
    %v1819 = vunpack.c.l.s4 1414812756
    %v1820 = vunpack.c.0.s8 %v1819
    %v1821 = vlaneseq
    %v1822 = vshrl.u32 %v1821, 7
    %v1823 = vsub.s32 %v1820, %v1822
    %v1824 = vrot.slane %v1715, %v1823
    %v1826 = vunpack.c.l.s4 1987475062
    %v1827 = vunpack.c.0.s8 %v1826
    %v1828 = vlaneseq
    %v1829 = vshrl.u32 %v1828, 7
    %v1830 = vsub.s32 %v1827, %v1829
    %v1831 = vrot.slane %v1715, %v1830
    %v1848 = vmul.f32 %v1692, %v1726
    %v1849 = vmul.f32 %v1693, %v1733
    %v1850 = vmul.f32 %v1694, %v1740
    %v1851 = vmul.f32 %v1695, %v1747
    %v1852 = vmul.f32 %v1696, %v1754
    %v1853 = vmul.f32 %v1697, %v1761
    %v1854 = vmul.f32 %v1698, %v1768
    %v1855 = vmul.f32 %v1699, %v1775
    %v1856 = vmul.f32 %v1700, %v1782
    %v1857 = vmul.f32 %v1701, %v1789
    %v1858 = vmul.f32 %v1702, %v1796
    %v1859 = vmul.f32 %v1703, %v1803
    %v1860 = vmul.f32 %v1704, %v1810
    %v1861 = vmul.f32 %v1705, %v1817
    %v1862 = vmul.f32 %v1706, %v1824
    %v1863 = vmul.f32 %v1707, %v1831
    %v1864 = vld [vmem:[#allocation7] sm:$0x1]
    %v1866 = vlaneseq
    %v1867 = vshrl.u32 %v1866, 7
    %v1868 = vsub.s32 0, %v1867
    %v1869 = vrot.slane %v1864, %v1868
    %v1870 = vcombine.high %v1869, %v1869
    %v1872 = vunpack.c.l.s4 1983009808
    %v1873 = vunpack.c.0.s8 %v1872
    %v1874 = vlaneseq
    %v1875 = vshrl.u32 %v1874, 7
    %v1876 = vsub.s32 %v1873, %v1875
    %v1877 = vrot.slane %v1869, %v1876
    %v1879 = vunpack.c.l.s4 1983009808
    %v1880 = vunpack.c.0.s8 %v1879
    %v1881 = vlaneseq
    %v1882 = vshrl.u32 %v1881, 7
    %v1883 = vsub.s32 %v1880, %v1882
    %v1884 = vrot.slane %v1870, %v1883
    %v1885 = vcombine.high %v1877, %v1877
    %v1886 = vcombine.high %v1884, %v1884
    %v1891 = vmul.f32 %v1848, %v1877
    %v1892 = vmul.f32 %v1849, %v1885
    %v1893 = vmul.f32 %v1850, %v1884
    %v1894 = vmul.f32 %v1851, %v1886
    %v1895 = vmul.f32 %v1852, %v1877
    %v1896 = vmul.f32 %v1853, %v1885
    %v1897 = vmul.f32 %v1854, %v1884
    %v1898 = vmul.f32 %v1855, %v1886
    %v1899 = vmul.f32 %v1856, %v1877
    %v1900 = vmul.f32 %v1857, %v1885
    %v1901 = vmul.f32 %v1858, %v1884
    %v1902 = vmul.f32 %v1859, %v1886
    %v1903 = vmul.f32 %v1860, %v1877
    %v1904 = vmul.f32 %v1861, %v1885
    %v1905 = vmul.f32 %v1862, %v1884
    %v1906 = vmul.f32 %v1863, %v1886
    %v1907 = vld [vmem:[#allocation8] sm:$0x1]
    %v1909 = vlaneseq
    %v1910 = vshrl.u32 %v1909, 7
    %v1911 = vsub.s32 0, %v1910
    %v1912 = vrot.slane %v1907, %v1911
    %v1913 = vcombine.high %v1912, %v1912
    %v1915 = vunpack.c.l.s4 1983009808
    %v1916 = vunpack.c.0.s8 %v1915
    %v1917 = vlaneseq
    %v1918 = vshrl.u32 %v1917, 7
    %v1919 = vsub.s32 %v1916, %v1918
    %v1920 = vrot.slane %v1912, %v1919
    %v1922 = vunpack.c.l.s4 1983009808
    %v1923 = vunpack.c.0.s8 %v1922
    %v1924 = vlaneseq
    %v1925 = vshrl.u32 %v1924, 7
    %v1926 = vsub.s32 %v1923, %v1925
    %v1927 = vrot.slane %v1913, %v1926
    %v1928 = vcombine.high %v1920, %v1920
    %v1929 = vcombine.high %v1927, %v1927
    %v1934 = vadd.f32 %v1891, %v1920
    %v1935 = vadd.f32 %v1892, %v1928
    %v1936 = vadd.f32 %v1893, %v1927
    %v1937 = vadd.f32 %v1894, %v1929
    %v1938 = vadd.f32 %v1895, %v1920
    %v1939 = vadd.f32 %v1896, %v1928
    %v1940 = vadd.f32 %v1897, %v1927
    %v1941 = vadd.f32 %v1898, %v1929
    %v1942 = vadd.f32 %v1899, %v1920
    %v1943 = vadd.f32 %v1900, %v1928
    %v1944 = vadd.f32 %v1901, %v1927
    %v1945 = vadd.f32 %v1902, %v1929
    %v1946 = vadd.f32 %v1903, %v1920
    %v1947 = vadd.f32 %v1904, %v1928
    %v1948 = vadd.f32 %v1905, %v1927
    %v1949 = vadd.f32 %v1906, %v1929
    %v1950 = vld [vmem:[%s8] sm:$0xf]
    %v1951 = vld [vmem:[%s8 + $0x4] sm:$0xf]
    %v1952 = vld [vmem:[%s8 + $0x8] sm:$0xf]
    %v1953 = vld [vmem:[%s8 + $0xc] sm:$0xf]
    %v1970 = vcombine.low %v1934, %v1935
    %v1971 = vcombine.low %v1936, %v1937
    %v1973 = vunpack.c.l.s4 1983009808
    %v1974 = vunpack.c.0.s8 %v1973
    %v1975 = vlaneseq
    %v1976 = vshrl.u32 %v1975, 7
    %v1977 = vsub.s32 %v1974, %v1976
    %v1978 = vrot.slane %v1970, %v1977
    %v1980 = vunpack.c.l.s4 1983009808
    %v1981 = vunpack.c.0.s8 %v1980
    %v1982 = vlaneseq
    %v1983 = vshrl.u32 %v1982, 7
    %v1984 = vsub.s32 %v1981, %v1983
    %v1985 = vrot.slane %v1971, %v1984
    %v1986 = vcombine.low %v1978, %v1985
    %v1987 = vcombine.low %v1938, %v1939
    %v1988 = vcombine.low %v1940, %v1941
    %v1990 = vunpack.c.l.s4 1983009808
    %v1991 = vunpack.c.0.s8 %v1990
    %v1992 = vlaneseq
    %v1993 = vshrl.u32 %v1992, 7
    %v1994 = vsub.s32 %v1991, %v1993
    %v1995 = vrot.slane %v1987, %v1994
    %v1997 = vunpack.c.l.s4 1983009808
    %v1998 = vunpack.c.0.s8 %v1997
    %v1999 = vlaneseq
    %v2000 = vshrl.u32 %v1999, 7
    %v2001 = vsub.s32 %v1998, %v2000
    %v2002 = vrot.slane %v1988, %v2001
    %v2003 = vcombine.low %v1995, %v2002
    %v2004 = vcombine.low %v1942, %v1943
    %v2005 = vcombine.low %v1944, %v1945
    %v2007 = vunpack.c.l.s4 1983009808
    %v2008 = vunpack.c.0.s8 %v2007
    %v2009 = vlaneseq
    %v2010 = vshrl.u32 %v2009, 7
    %v2011 = vsub.s32 %v2008, %v2010
    %v2012 = vrot.slane %v2004, %v2011
    %v2014 = vunpack.c.l.s4 1983009808
    %v2015 = vunpack.c.0.s8 %v2014
    %v2016 = vlaneseq
    %v2017 = vshrl.u32 %v2016, 7
    %v2018 = vsub.s32 %v2015, %v2017
    %v2019 = vrot.slane %v2005, %v2018
    %v2020 = vcombine.low %v2012, %v2019
    %v2021 = vcombine.low %v1946, %v1947
    %v2022 = vcombine.low %v1948, %v1949
    %v2024 = vunpack.c.l.s4 1983009808
    %v2025 = vunpack.c.0.s8 %v2024
    %v2026 = vlaneseq
    %v2027 = vshrl.u32 %v2026, 7
    %v2028 = vsub.s32 %v2025, %v2027
    %v2029 = vrot.slane %v2021, %v2028
    %v2031 = vunpack.c.l.s4 1983009808
    %v2032 = vunpack.c.0.s8 %v2031
    %v2033 = vlaneseq
    %v2034 = vshrl.u32 %v2033, 7
    %v2035 = vsub.s32 %v2032, %v2034
    %v2036 = vrot.slane %v2022, %v2035
    %v2037 = vcombine.low %v2029, %v2036
    %v2042 = vpack.c.bf16 %v2003, %v1986
    %v2043 = vpack.c.bf16 %v2037, %v2020
    %v2044 = vld [vmem:[#allocation10] sm:$0x1]
    %v2046 = vlaneseq
    %v2047 = vshrl.u32 %v2046, 7
    %v2048 = vsub.s32 0, %v2047
    %v2049 = vrot.slane %v2044, %v2048
    %v2055 = vunpack.c.l.b16 %v1950
    %v2056 = vunpack.c.l.b16 %v1951
    %v2057 = vunpack.c.l.b16 %v1952
    %v2058 = vunpack.c.l.b16 %v1953
    %v2059 = vpack.c.b16 %v2056, %v2055
    %v2060 = vpack.c.b16 %v2058, %v2057
    %v2064 = vsel %vm320, %v2042, 0
    %v2067 = vsel %vm320, %v2043, 0
    %2069 = vmatprep.subr.bf16.mxu0 0
    %2070 = vmatpush1.bf16.msra.mxu0 0
    %2071 = vmatprep.subr.bf16.mxu0 0
    %2072 = vmatpush1.bf16.msra.mxu0 0
    %2073 = vmatprep.subr.bf16.mxu0 0
    %2074 = vmatpush1.bf16.msra.mxu0 0
    %2075 = vmatprep.subr.bf16.mxu0 0
    %2076 = vmatpush1.bf16.msra.mxu0 0
    %2077 = vmatprep.subr.bf16.mxu0 0
    %2078 = vmatpush1.bf16.msra.mxu0 0
    %2079 = vmatprep.subr.bf16.mxu0 0
    %2080 = vmatpush1.bf16.msra.mxu0 0
    %2081 = vmatprep.subr.bf16.mxu0 0
    %2082 = vmatpush1.bf16.msra.mxu0 %v2060
    %2083 = vmatprep.subr.bf16.mxu0 0
    %2084 = vmatpush1.bf16.msra.mxu0 %v2059
    %2085 = vmatprep.subr.bf16.mxu0 0
    %2086 = vmatpush2.bf16.msra.mxu0 0
    %2087 = vmatprep.subr.bf16.mxu0 0
    %2088 = vmatpush2.bf16.msra.mxu0 0
    %2089 = vmatprep.subr.bf16.mxu0 0
    %2090 = vmatpush2.bf16.msra.mxu0 0
    %2091 = vmatprep.subr.bf16.mxu0 0
    %2092 = vmatpush2.bf16.msra.mxu0 0
    %2093 = vmatprep.subr.bf16.mxu0 0
    %2094 = vmatpush2.bf16.msra.mxu0 0
    %2095 = vmatprep.subr.bf16.mxu0 0
    %2096 = vmatpush2.bf16.msra.mxu0 0
    %2097 = vmatprep.subr.bf16.mxu0 0
    %2098 = vmatpush2.bf16.msra.mxu0 0
    %2099 = vmatprep.subr.bf16.mxu0 0
    %2100 = vmatpush2.bf16.msra.mxu0 0
    %2101 = vmatprep.mubr.bf16.mxu0 0
    %2102 = vmatmul.mubr.bf16.gmra.mxu0 %v2064
    %v2103 = vpop.f32.mrf.mxu0
    %v2104 = vadd.f32 %v2049, %v2103
    %v2105 = vpop.f32.mrf.mxu0
    %v2106 = vpop.f32.mrf.mxu0
    %v2107 = vadd.f32 %v2049, %v2106
    %v2108 = vpop.f32.mrf.mxu0
    %2109 = vmatprep.mubr.bf16.mxu0 0
    %2110 = vmatmul.mubr.bf16.gmra.mxu0 %v2067
    %v2111 = vpop.f32.mrf.mxu0
    %v2112 = vadd.f32 %v2049, %v2111
    %v2113 = vpop.f32.mrf.mxu0
    %v2114 = vpop.f32.mrf.mxu0
    %v2115 = vadd.f32 %v2049, %v2114
    %v2116 = vpop.f32.mrf.mxu0
    %2117 = vdwg.mxu0
    %v2118 = vmax.f32 %v2104, 0.0
    %v2119 = vmax.f32 %v2107, 0.0
    %v2120 = vmax.f32 %v2112, 0.0
    %v2121 = vmax.f32 %v2115, 0.0
    %v2122 = vld [vmem:[%s10] sm:$0xf]
    %v2123 = vld [vmem:[%s10 + $0x4] sm:$0xf]
    %v2124 = vld [vmem:[%s10 + $0x8] sm:$0xf]
    %v2125 = vld [vmem:[%s10 + $0xc] sm:$0xf]
    %v2126 = vld [vmem:[%s10 + $0x10] sm:$0xf]
    %v2127 = vld [vmem:[%s10 + $0x14] sm:$0xf]
    %v2128 = vld [vmem:[%s10 + $0x18] sm:$0xf]
    %v2129 = vld [vmem:[%s10 + $0x1c] sm:$0xf]
    %v2130 = vld [vmem:[%s10 + $0x20] sm:$0xf]
    %v2131 = vld [vmem:[%s10 + $0x24] sm:$0xf]
    %v2132 = vld [vmem:[%s10 + $0x28] sm:$0xf]
    %v2133 = vld [vmem:[%s10 + $0x2c] sm:$0xf]
    %v2134 = vld [vmem:[%s10 + $0x30] sm:$0xf]
    %v2135 = vld [vmem:[%s10 + $0x34] sm:$0xf]
    %v2136 = vld [vmem:[%s10 + $0x38] sm:$0xf]
    %v2137 = vld [vmem:[%s10 + $0x3c] sm:$0xf]
    %v2138 = vpack.c.bf16 %v2119, %v2118
    %v2139 = vpack.c.bf16 %v2121, %v2120
    %v2156 = vunpack.c.l.b16 %v2122
    %v2157 = vunpack.c.l.b16 %v2123
    %v2158 = vunpack.c.l.b16 %v2124
    %v2159 = vunpack.c.l.b16 %v2125
    %v2160 = vunpack.c.l.b16 %v2126
    %v2161 = vunpack.c.l.b16 %v2127
    %v2162 = vunpack.c.l.b16 %v2128
    %v2163 = vunpack.c.l.b16 %v2129
    %v2164 = vunpack.c.l.b16 %v2130
    %v2165 = vunpack.c.l.b16 %v2131
    %v2166 = vunpack.c.l.b16 %v2132
    %v2167 = vunpack.c.l.b16 %v2133
    %v2168 = vunpack.c.l.b16 %v2134
    %v2169 = vunpack.c.l.b16 %v2135
    %v2170 = vunpack.c.l.b16 %v2136
    %v2171 = vunpack.c.l.b16 %v2137
    %v2172 = vpack.c.b16 %v2157, %v2156
    %v2173 = vpack.c.b16 %v2159, %v2158
    %v2174 = vpack.c.b16 %v2161, %v2160
    %v2175 = vpack.c.b16 %v2163, %v2162
    %v2176 = vpack.c.b16 %v2165, %v2164
    %v2177 = vpack.c.b16 %v2167, %v2166
    %v2178 = vpack.c.b16 %v2169, %v2168
    %v2179 = vpack.c.b16 %v2171, %v2170
    %2188 = vmatprep.subr.bf16.mxu0 0
    %2189 = vmatpush1.bf16.msra.mxu0 %v2179
    %2190 = vmatprep.subr.bf16.mxu0 0
    %2191 = vmatpush1.bf16.msra.mxu0 %v2178
    %2192 = vmatprep.subr.bf16.mxu0 0
    %2193 = vmatpush1.bf16.msra.mxu0 %v2177
    %2194 = vmatprep.subr.bf16.mxu0 0
    %2195 = vmatpush1.bf16.msra.mxu0 %v2176
    %2196 = vmatprep.subr.bf16.mxu0 0
    %2197 = vmatpush1.bf16.msra.mxu0 %v2175
    %2198 = vmatprep.subr.bf16.mxu0 0
    %2199 = vmatpush1.bf16.msra.mxu0 %v2174
    %2200 = vmatprep.subr.bf16.mxu0 0
    %2201 = vmatpush1.bf16.msra.mxu0 %v2173
    %2202 = vmatprep.subr.bf16.mxu0 0
    %2203 = vmatpush1.bf16.msra.mxu0 %v2172
    %2204 = vmatprep.subr.bf16.mxu0 0
    %2205 = vmatpush2.bf16.msra.mxu0 0
    %2206 = vmatprep.subr.bf16.mxu0 0
    %2207 = vmatpush2.bf16.msra.mxu0 0
    %2208 = vmatprep.subr.bf16.mxu0 0
    %2209 = vmatpush2.bf16.msra.mxu0 0
    %2210 = vmatprep.subr.bf16.mxu0 0
    %2211 = vmatpush2.bf16.msra.mxu0 0
    %2212 = vmatprep.subr.bf16.mxu0 0
    %2213 = vmatpush2.bf16.msra.mxu0 0
    %2214 = vmatprep.subr.bf16.mxu0 0
    %2215 = vmatpush2.bf16.msra.mxu0 0
    %2216 = vmatprep.subr.bf16.mxu0 0
    %2217 = vmatpush2.bf16.msra.mxu0 0
    %2218 = vmatprep.subr.bf16.mxu0 0
    %2219 = vmatpush2.bf16.msra.mxu0 0
    %2220 = vmatprep.mubr.bf16.mxu0 0
    %2221 = vmatmul.mubr.bf16.gmra.mxu0 %v2138
    %v2222 = vpop.f32.mrf.mxu0
    %v2223 = vadd.f32 0.0, %v2222
    %v2224 = vpop.f32.mrf.mxu0
    %v2225 = vpop.f32.mrf.mxu0
    %v2226 = vadd.f32 0.0, %v2225
    %v2227 = vpop.f32.mrf.mxu0
    %2228 = vmatprep.mubr.bf16.mxu0 0
    %2229 = vmatmul.mubr.bf16.gmra.mxu0 %v2139
    %v2230 = vpop.f32.mrf.mxu0
    %v2231 = vadd.f32 0.0, %v2230
    %v2232 = vpop.f32.mrf.mxu0
    %v2233 = vpop.f32.mrf.mxu0
    %v2234 = vadd.f32 0.0, %v2233
    %v2235 = vpop.f32.mrf.mxu0
    %2236 = vdwg.mxu0
    %v2241 = vcombine.high %v2223, %v2223
    %v2243 = vunpack.c.l.s4 1983009808
    %v2244 = vunpack.c.0.s8 %v2243
    %v2245 = vlaneseq
    %v2246 = vshrl.u32 %v2245, 7
    %v2247 = vsub.s32 %v2244, %v2246
    %v2248 = vrot.slane %v2223, %v2247
    %v2250 = vunpack.c.l.s4 1983009808
    %v2251 = vunpack.c.0.s8 %v2250
    %v2252 = vlaneseq
    %v2253 = vshrl.u32 %v2252, 7
    %v2254 = vsub.s32 %v2251, %v2253
    %v2255 = vrot.slane %v2241, %v2254
    %v2256 = vcombine.high %v2248, %v2248
    %v2257 = vcombine.high %v2255, %v2255
    %v2258 = vcombine.high %v2226, %v2226
    %v2260 = vunpack.c.l.s4 1983009808
    %v2261 = vunpack.c.0.s8 %v2260
    %v2262 = vlaneseq
    %v2263 = vshrl.u32 %v2262, 7
    %v2264 = vsub.s32 %v2261, %v2263
    %v2265 = vrot.slane %v2226, %v2264
    %v2267 = vunpack.c.l.s4 1983009808
    %v2268 = vunpack.c.0.s8 %v2267
    %v2269 = vlaneseq
    %v2270 = vshrl.u32 %v2269, 7
    %v2271 = vsub.s32 %v2268, %v2270
    %v2272 = vrot.slane %v2258, %v2271
    %v2273 = vcombine.high %v2265, %v2265
    %v2274 = vcombine.high %v2272, %v2272
    %v2275 = vcombine.high %v2231, %v2231
    %v2277 = vunpack.c.l.s4 1983009808
    %v2278 = vunpack.c.0.s8 %v2277
    %v2279 = vlaneseq
    %v2280 = vshrl.u32 %v2279, 7
    %v2281 = vsub.s32 %v2278, %v2280
    %v2282 = vrot.slane %v2231, %v2281
    %v2284 = vunpack.c.l.s4 1983009808
    %v2285 = vunpack.c.0.s8 %v2284
    %v2286 = vlaneseq
    %v2287 = vshrl.u32 %v2286, 7
    %v2288 = vsub.s32 %v2285, %v2287
    %v2289 = vrot.slane %v2275, %v2288
    %v2290 = vcombine.high %v2282, %v2282
    %v2291 = vcombine.high %v2289, %v2289
    %v2292 = vcombine.high %v2234, %v2234
    %v2294 = vunpack.c.l.s4 1983009808
    %v2295 = vunpack.c.0.s8 %v2294
    %v2296 = vlaneseq
    %v2297 = vshrl.u32 %v2296, 7
    %v2298 = vsub.s32 %v2295, %v2297
    %v2299 = vrot.slane %v2234, %v2298
    %v2301 = vunpack.c.l.s4 1983009808
    %v2302 = vunpack.c.0.s8 %v2301
    %v2303 = vlaneseq
    %v2304 = vshrl.u32 %v2303, 7
    %v2305 = vsub.s32 %v2302, %v2304
    %v2306 = vrot.slane %v2292, %v2305
    %v2307 = vcombine.high %v2299, %v2299
    %v2308 = vcombine.high %v2306, %v2306
    %v2325 = vadd.f32 %v1934, %v2248
    %v2326 = vadd.f32 %v1935, %v2256
    %v2327 = vadd.f32 %v1936, %v2255
    %v2328 = vadd.f32 %v1937, %v2257
    %v2329 = vadd.f32 %v1938, %v2265
    %v2330 = vadd.f32 %v1939, %v2273
    %v2331 = vadd.f32 %v1940, %v2272
    %v2332 = vadd.f32 %v1941, %v2274
    %v2333 = vadd.f32 %v1942, %v2282
    %v2334 = vadd.f32 %v1943, %v2290
    %v2335 = vadd.f32 %v1944, %v2289
    %v2336 = vadd.f32 %v1945, %v2291
    %v2337 = vadd.f32 %v1946, %v2299
    %v2338 = vadd.f32 %v1947, %v2307
    %v2339 = vadd.f32 %v1948, %v2306
    %v2340 = vadd.f32 %v1949, %v2308
    %v2341 = vld [vmem:[#allocation11] sm:$0x1]
    %v2343 = vlaneseq
    %v2344 = vshrl.u32 %v2343, 7
    %v2345 = vsub.s32 0, %v2344
    %v2346 = vrot.slane %v2341, %v2345
    %v2347 = vcombine.high %v2346, %v2346
    %v2349 = vunpack.c.l.s4 1983009808
    %v2350 = vunpack.c.0.s8 %v2349
    %v2351 = vlaneseq
    %v2352 = vshrl.u32 %v2351, 7
    %v2353 = vsub.s32 %v2350, %v2352
    %v2354 = vrot.slane %v2346, %v2353
    %v2356 = vunpack.c.l.s4 1983009808
    %v2357 = vunpack.c.0.s8 %v2356
    %v2358 = vlaneseq
    %v2359 = vshrl.u32 %v2358, 7
    %v2360 = vsub.s32 %v2357, %v2359
    %v2361 = vrot.slane %v2347, %v2360
    %v2362 = vcombine.high %v2354, %v2354
    %v2363 = vcombine.high %v2361, %v2361
    %v2368 = vadd.f32 %v2325, %v2354
    %v2369 = vadd.f32 %v2326, %v2362
    %v2370 = vadd.f32 %v2327, %v2361
    %v2371 = vadd.f32 %v2328, %v2363
    %v2372 = vadd.f32 %v2329, %v2354
    %v2373 = vadd.f32 %v2330, %v2362
    %v2374 = vadd.f32 %v2331, %v2361
    %v2375 = vadd.f32 %v2332, %v2363
    %v2376 = vadd.f32 %v2333, %v2354
    %v2377 = vadd.f32 %v2334, %v2362
    %v2378 = vadd.f32 %v2335, %v2361
    %v2379 = vadd.f32 %v2336, %v2363
    %v2380 = vadd.f32 %v2337, %v2354
    %v2381 = vadd.f32 %v2338, %v2362
    %v2382 = vadd.f32 %v2339, %v2361
    %v2383 = vadd.f32 %v2340, %v2363
    %vm2384 = vcmask 254976
    %2385 = vst.msk [vmem:[#allocation13] sm:$0x3] %vm2384, %v2368
    %2386 = vst.msk [vmem:[#allocation13 + $0x2] sm:$0x3] %vm2384, %v2369
    %2387 = vst.msk [vmem:[#allocation13 + $0x4] sm:$0x3] %vm2384, %v2370
    %2388 = vst.msk [vmem:[#allocation13 + $0x6] sm:$0x3] %vm2384, %v2371
    %2389 = vst.msk [vmem:[#allocation13 + $0x8] sm:$0x3] %vm2384, %v2372
    %2390 = vst.msk [vmem:[#allocation13 + $0xa] sm:$0x3] %vm2384, %v2373
    %2391 = vst.msk [vmem:[#allocation13 + $0xc] sm:$0x3] %vm2384, %v2374
    %2392 = vst.msk [vmem:[#allocation13 + $0xe] sm:$0x3] %vm2384, %v2375
    %2393 = vst.msk [vmem:[#allocation14] sm:$0x3] %vm2384, %v2376
    %2394 = vst.msk [vmem:[#allocation14 + $0x2] sm:$0x3] %vm2384, %v2377
    %2395 = vst.msk [vmem:[#allocation14 + $0x4] sm:$0x3] %vm2384, %v2378
    %2396 = vst.msk [vmem:[#allocation14 + $0x6] sm:$0x3] %vm2384, %v2379
    %2397 = vst.msk [vmem:[#allocation14 + $0x8] sm:$0x3] %vm2384, %v2380
    %2398 = vst.msk [vmem:[#allocation14 + $0xa] sm:$0x3] %vm2384, %v2381
    %2399 = vst.msk [vmem:[#allocation14 + $0xc] sm:$0x3] %vm2384, %v2382
    %2400 = vst.msk [vmem:[#allocation14 + $0xe] sm:$0x3] %vm2384, %v2383
    // Predicated region
    $region74: #{vlsa_adapter.1} parent=1 // pred_check
      _
    $region75: #{vlsa_adapter.1} parent=1 // pred_check_branch
      %2402 = sbr.rel (0) target = $region77
    $region76: #{vlsa_adapter.1} parent=1 // pred_region
      %s2404 = ssub.s32 256, 256
      %2405 = vsyncadd [#allocation4], %s2404
      %s2406 = sshll.u32 [#allocation13], 4
      %s2407 = int_to_ptr.vmem [resolvable:$true] %s2406
      %2412 = dma.vmem_to_hbm [thread:$0]  %s2407, 256, %s12, [#allocation4], 32, 32, 2
    $region77: #{vlsa_adapter.1} parent=1 // pred_fallthru
      _
    // Predicated region
    $region78: #{vlsa_adapter.1} parent=1 // pred_check
      _
    $region79: #{vlsa_adapter.1} parent=1 // pred_check_branch
      %2414 = sbr.rel (0) target = $region81
    $region80: #{vlsa_adapter.1} parent=1 // pred_region
      %s2416 = ssub.s32 256, 256
      %2417 = vsyncadd [#allocation15], %s2416
      %s2418 = sshll.u32 [#allocation14], 4
      %s2419 = int_to_ptr.vmem [resolvable:$true] %s2418
      %2424 = dma.vmem_to_hbm [thread:$0]  %s2419, 256, %s13, [#allocation15], 32, 32, 2
    $region81: #{vlsa_adapter.1} parent=1 // pred_fallthru
      _
    // Predicated region
    $region82: #{vlsa_adapter.1} parent=1 // pred_check
      _
    $region83: #{vlsa_adapter.1} parent=1 // pred_check_branch
      %2426 = sbr.rel (0) target = $region85
    $region84: #{vlsa_adapter.1} parent=1 // pred_region
      %2427 = dma.done [#allocation4], 256
    $region85: #{vlsa_adapter.1} parent=1 // pred_fallthru
      _
    // Predicated region
    $region86: #{vlsa_adapter.1} parent=1 // pred_check
      _
    $region87: #{vlsa_adapter.1} parent=1 // pred_check_branch
      %2429 = sbr.rel (0) target = $region89
    $region88: #{vlsa_adapter.1} parent=1 // pred_region
      %2430 = dma.done [#allocation15], 256
    $region89: #{vlsa_adapter.1} parent=1 // pred_fallthru
      _
    %2431 = vsyncpa [#allocation3], 1
    %2432 = vsyncpa [#allocation6], 1
    %2433 = vsyncpa [#allocation9], 1
    %2434 = vsyncpa [#allocation12], 1
    %2435 = vsyncpa [#allocation4], 1
    %2436 = vsyncpa [#allocation15], 1

</llo_original>
